<compile_context>
chip_gen: v5e
topology: v5e:2x2
jax: 0.10.0
libtpu: 0.0.40
codegen_flags: <defaults>
</compile_context>

<pallas_src>
import functools

import jax
import jax.numpy as jnp
from jax.experimental import pallas as pl
from jax.experimental.pallas import tpu as pltpu

LEAKY_SLOPE = 0.01
BN_EPS = 1e-5

KERNEL_SIZES = (5, 4, 3, 4)
STRIDES = (5, 2, 1, 1)
PADS = (0, 3, 2, 3)  # nn.ConstantPad1d((k-1, 0)) before convs 2..4


def _bn_lrelu(y):
    """BatchNorm1d (training-mode batch statistics, gamma=1/beta=0 init) + LeakyReLU(0.01)."""
    mean = jnp.mean(y, axis=0, keepdims=True)
    var = jnp.mean(jnp.square(y - mean), axis=0, keepdims=True)  # biased var for normalization
    yn = (y - mean) * jax.lax.rsqrt(var + BN_EPS)
    return jnp.where(yn >= 0.0, yn, LEAKY_SLOPE * yn)
    # TODO(synk): BatchNorm running statistics (eval-mode buffers) are not updated/tracked.


def _build_cpc_kernel(N, H, L, t_outs, t_d, t_lab):
    """Returns the fused CPC forward kernel for static sizes."""
    t1, t2, t3, t4 = t_outs
    pad2, pad3, pad4 = PADS[1], PADS[2], PADS[3]
    T2p, T3p, T4p = pad2 + t1, pad3 + t2, pad4 + t3

    def write_act(act_ref, y, pad, t_prev, T_pad):
        # scatter [N*t_prev, H] n-major rows into the left-zero-padded activation scratch
        for n in range(N):
            act_ref[pl.ds(n * T_pad, pad), :] = jnp.zeros((pad, H), jnp.float32)
            act_ref[pl.ds(n * T_pad + pad, t_prev), :] = y[n * t_prev:(n + 1) * t_prev, :]

    def conv_layer(act_ref, w_ref, ksize, stride, t_out, T_pad):
        # in-VMEM im2col via (strided) ref slices, then one matmul + BN + LeakyReLU
        pieces = []
        for n in range(N):
            cols = []
            for k in range(ksize):
                if stride == 1:
                    cols.append(act_ref[pl.ds(n * T_pad + k, t_out), :])
                else:
                    cols.append(act_ref[pl.ds(n * T_pad + k, t_out, stride=stride), :])
            pieces.append(jnp.concatenate(cols, axis=-1))          # [t_out, ksize*H] (lane dense)
        patches = jnp.concatenate(pieces, axis=0)                  # [N*t_out, ksize*H]
        y = jnp.dot(patches, w_ref[...], preferred_element_type=jnp.float32)
        return _bn_lrelu(y)                                        # [N*t_out, H]

    def kernel(p1_ref, w1_ref, w2_ref, w3_ref, w4_ref,
               wih_ref, whh_ref, bih_ref, bhh_ref, h0_ref,
               wpred_ref, bpred_ref,
               ct_ref, nce_ref, acc_ref,
               act2, act3, act4):
        # ------------- encoder: 4x (conv -> batch-stat BN -> LeakyReLU), all in VMEM
        y1 = _bn_lrelu(jnp.dot(p1_ref[...], w1_ref[...],
                               preferred_element_type=jnp.float32))          # [N*t1, H]
        write_act(act2, y1, pad2, t1, T2p)
        y2 = conv_layer(act2, w2_ref, KERNEL_SIZES[1], STRIDES[1], t2, T2p)
        write_act(act3, y2, pad3, t2, T3p)
        y3 = conv_layer(act3, w3_ref, KERNEL_SIZES[2], STRIDES[2], t3, T3p)
        write_act(act4, y3, pad4, t3, T4p)
        y4 = conv_layer(act4, w4_ref, KERNEL_SIZES[3], STRIDES[3], t4, T4p)  # [N*t4, H]

        # ------------- GRU: input projection hoisted out of the recurrence (one bulk matmul)
        gi_all = jnp.dot(y4, wih_ref[...],
                         preferred_element_type=jnp.float32) + bih_ref[...]  # [N*t4, 3L]
        whh = whh_ref[...]
        bhh = bhh_ref[...]
        h = h0_ref[...]                                                      # [N, L]
        for t in range(t_d):  # static trip count -> fully unrolled recurrence
            gi = jnp.concatenate(
                [gi_all[n * t4 + t:n * t4 + t + 1, :] for n in range(N)], axis=0)   # [N, 3L]
            gh = jnp.dot(h, whh, preferred_element_type=jnp.float32) + bhh           # [N, 3L]
            r = jax.nn.sigmoid(gi[:, 0 * L:1 * L] + gh[:, 0 * L:1 * L])
            z = jax.nn.sigmoid(gi[:, 1 * L:2 * L] + gh[:, 1 * L:2 * L])
            ng = jnp.tanh(gi[:, 2 * L:3 * L] + r * gh[:, 2 * L:3 * L])
            h = (1.0 - z) * ng + z * h
        ct_ref[...] = h                                                      # c_t == final hidden

        # ------------- linear prediction + batched NCE scoring over all label steps
        pred = jnp.dot(h, wpred_ref[...],
                       preferred_element_type=jnp.float32) + bpred_ref[...]  # [N, t_lab*H]
        pred3 = jnp.stack([pred[:, t * H:(t + 1) * H] for t in range(t_lab)],
                          axis=0)                                            # [t_lab, N, H]
        zfut = jnp.stack(
            [jnp.concatenate([y4[n * t4 + t_d + t:n * t4 + t_d + t + 1, :]
                              for n in range(N)], axis=0)
             for t in range(t_lab)], axis=0)                                 # [t_lab, N, H]
        total = jax.lax.dot_general(pred3, zfut, (((2,), (2,)), ((0,), (0,))),
                                    preferred_element_type=jnp.float32)      # [t_lab, N, N]

        row_max = jnp.max(total, axis=-1, keepdims=True)                     # [t_lab, N, 1]
        lse = row_max + jnp.log(jnp.sum(jnp.exp(total - row_max),
                                        axis=-1, keepdims=True))
        rows3 = jax.lax.broadcasted_iota(jnp.int32, (t_lab, N, N), 1)
        cols3 = jax.lax.broadcasted_iota(jnp.int32, (t_lab, N, N), 2)
        diag = jnp.sum(jnp.where(rows3 == cols3, total, 0.0),
                       axis=-1, keepdims=True)                               # [t_lab, N, 1]
        nce3 = diag - lse                                                    # log_softmax diagonal

        # argmax(dim=-1) with PyTorch tie-break (first max index), compared to label == row
        masked_cols = jnp.where(total == row_max, cols3, N)
        first_max = jnp.min(masked_cols, axis=-1, keepdims=True)             # [t_lab, N, 1]
        label = jax.lax.broadcasted_iota(jnp.int32, (t_lab, N, 1), 1)
        corr3 = (first_max == label).astype(jnp.float32)

        inv = 1.0 / (N * t_lab)
        nce_ref[...] = jnp.sum(jnp.sum(nce3, axis=0), axis=0, keepdims=True) * (-inv)
        acc_ref[...] = jnp.sum(jnp.sum(corr3, axis=0), axis=0, keepdims=True) * inv

    return kernel


# ----------------------------- wrapper ---------------------------------------

def _conv_w_to_mat(w):
    # PyTorch conv weight [O, C, K] -> [K*C, O], matching the k-major im2col patch layout
    O, C, K = w.shape
    return jnp.transpose(w, (2, 1, 0)).reshape(K * C, O)


@functools.partial(jax.jit, static_argnums=(3,))
def cpc_forward(x, hidden, params, num_enc_data):
    """CPCEncoder.forward: returns (c_t, accuracy, nce, hidden_out)."""
    N = x.shape[0]
    H = params["conv_weights"][0].shape[0]
    L = params["gru_w_hh"].shape[0]
    k0 = KERNEL_SIZES[0]

    # F.pad(x, [-T % 5, 0]); conv1 has stride == kernel, so its im2col is a pure reshape
    x = jnp.pad(x, ((0, 0), (0, 0), ((-x.shape[-1]) % k0, 0)))
    t1 = x.shape[-1] // k0
    kpad = (-k0) % 8                                  # pad contraction dim 5 -> 8 (sublane multiple)
    p1 = jnp.pad(x.reshape(N * t1, k0), ((0, 0), (0, kpad)))
    w1 = jnp.pad(_conv_w_to_mat(params["conv_weights"][0]), ((0, kpad), (0, 0)))
    w2 = _conv_w_to_mat(params["conv_weights"][1])
    w3 = _conv_w_to_mat(params["conv_weights"][2])
    w4 = _conv_w_to_mat(params["conv_weights"][3])

    t2 = (t1 + PADS[1] - KERNEL_SIZES[1]) // STRIDES[1] + 1
    t3 = (t2 + PADS[2] - KERNEL_SIZES[2]) // STRIDES[2] + 1
    t4 = (t3 + PADS[3] - KERNEL_SIZES[3]) // STRIDES[3] + 1
    t_d = num_enc_data
    t_lab = t4 - t_d
    assert t_lab >= 1 and params["pred_w"].shape[1] == t_lab * H

    kernel = _build_cpc_kernel(N, H, L, (t1, t2, t3, t4), t_d, t_lab)
    vmem = lambda: pl.BlockSpec(memory_space=pltpu.MemorySpace.VMEM)

    c_t, nce, acc = pl.pallas_call(
        kernel,
        out_shape=(jax.ShapeDtypeStruct((N, L), jnp.float32),
                   jax.ShapeDtypeStruct((1, 1), jnp.float32),
                   jax.ShapeDtypeStruct((1, 1), jnp.float32)),
        in_specs=[vmem() for _ in range(12)],
        out_specs=(vmem(), vmem(), vmem()),
        scratch_shapes=[
            pltpu.VMEM((N * (PADS[1] + t1), H), jnp.float32),   # padded layer-1 activations
            pltpu.VMEM((N * (PADS[2] + t2), H), jnp.float32),   # padded layer-2 activations
            pltpu.VMEM((N * (PADS[3] + t3), H), jnp.float32),   # padded layer-3 activations
        ],
    )(p1, w1, w2, w3, w4,
      params["gru_w_ih"], params["gru_w_hh"], params["gru_b_ih"],
      params["gru_b_hh"], hidden[0], params["pred_w"], params["pred_b"])

    # TODO(synk): PyTorch returns accuracy via .item() (python float); here it stays a JAX scalar.
    return c_t, acc[0, 0], nce[0, 0], c_t.reshape(1, N, L)


def _encoder_out_len_no_initial_pad(t):
    # mirrors Encoder.get_factor (calls self.encoder directly on length-100 input)
    for k, s, p in zip(KERNEL_SIZES, STRIDES, PADS):
        t = (t + p - k) // s + 1
    return t


# ----------------------------- parameter init --------------------------------

def init_params(key, dim_hidden, dim_latent, num_enc_label):
    ks = jax.random.split(key, 10)

    def u(k, shape, fan_in):
        bound = 1.0 / (fan_in ** 0.5)
        return jax.random.uniform(k, shape, jnp.float32, -bound, bound)

    conv_weights = [
        u(ks[0], (dim_hidden, 1, 5), 1 * 5),
        u(ks[1], (dim_hidden, dim_hidden, 4), dim_hidden * 4),
        u(ks[2], (dim_hidden, dim_hidden, 3), dim_hidden * 3),
        u(ks[3], (dim_hidden, dim_hidden, 4), dim_hidden * 4),
    ]
    # GRU weights pre-transposed for x @ W layout; gate order (r, z, n)
    gru_w_ih = u(ks[4], (dim_hidden, 3 * dim_latent), dim_latent)
    gru_w_hh = u(ks[5], (dim_latent, 3 * dim_latent), dim_latent)
    gru_b_ih = u(ks[6], (1, 3 * dim_latent), dim_latent)
    gru_b_hh = u(ks[7], (1, 3 * dim_latent), dim_latent)
    out_dim = dim_hidden * num_enc_label
    pred_w = u(ks[8], (dim_latent, out_dim), dim_latent)   # Linear weight^T
    pred_b = u(ks[9], (1, out_dim), dim_latent)
    return dict(conv_weights=conv_weights, gru_w_ih=gru_w_ih, gru_w_hh=gru_w_hh,
                gru_b_ih=gru_b_ih, gru_b_hh=gru_b_hh, pred_w=pred_w, pred_b=pred_b)


# ----------------------------- main -------------------------------------------

if __name__ == "__main__":
    dim_hidden = 32
    dim_latent = 16
    num_timesteps_data = 100
    num_timesteps_label = 40

    enc_factor = _encoder_out_len_no_initial_pad(100) / 100.0   # == 0.1
    num_enc_data = int(num_timesteps_data * enc_factor)         # 10
    num_enc_label = int(num_timesteps_label * enc_factor)       # 4

    N = 2
    key = jax.random.PRNGKey(0)
    kp, kx = jax.random.split(key)
    params = init_params(kp, dim_hidden, dim_latent, num_enc_label)

    x = jax.random.normal(kx, (N, 1, num_timesteps_data + num_timesteps_label),
                          jnp.float32)
    hidden = jnp.zeros((1, N, dim_latent), jnp.float32)         # CPCEncoder.init_hidden

    c_t, accuracy, nce, hidden_out = cpc_forward(x, hidden, params, num_enc_data)
    jax.block_until_ready((c_t, accuracy, nce, hidden_out))
    print("KERNEL_OK")
</pallas_src>

<mosaic_0001>
module attributes {stable_mosaic.version = 11 : i64} {
  func.func @kernel(%arg0: memref<56x8xf32, #tpu.memory_space<vmem>>, %arg1: memref<8x32xf32, #tpu.memory_space<vmem>>, %arg2: memref<128x32xf32, #tpu.memory_space<vmem>>, %arg3: memref<96x32xf32, #tpu.memory_space<vmem>>, %arg4: memref<128x32xf32, #tpu.memory_space<vmem>>, %arg5: memref<32x48xf32, #tpu.memory_space<vmem>>, %arg6: memref<16x48xf32, #tpu.memory_space<vmem>>, %arg7: memref<1x48xf32, #tpu.memory_space<vmem>>, %arg8: memref<1x48xf32, #tpu.memory_space<vmem>>, %arg9: memref<2x16xf32, #tpu.memory_space<vmem>>, %arg10: memref<16x128xf32, #tpu.memory_space<vmem>>, %arg11: memref<1x128xf32, #tpu.memory_space<vmem>>, %arg12: memref<2x16xf32, #tpu.memory_space<vmem>>, %arg13: memref<1x1xf32, #tpu.memory_space<vmem>>, %arg14: memref<1x1xf32, #tpu.memory_space<vmem>>, %arg15: memref<62x32xf32, #tpu.memory_space<vmem>>, %arg16: memref<32x32xf32, #tpu.memory_space<vmem>>, %arg17: memref<34x32xf32, #tpu.memory_space<vmem>>) attributes {dimension_semantics = [], scalar_prefetch = 0 : i64, scratch_operands = 3 : i64, tpu.core_type = #tpu.core_type<tc>} {
    %c0 = arith.constant 0 : index
    %c0_0 = arith.constant 0 : index
    %0 = vector.load %arg0[%c0, %c0_0] : memref<56x8xf32, #tpu.memory_space<vmem>>, vector<56x8xf32>
    %c0_1 = arith.constant 0 : index
    %c0_2 = arith.constant 0 : index
    %1 = vector.load %arg1[%c0_1, %c0_2] : memref<8x32xf32, #tpu.memory_space<vmem>>, vector<8x32xf32>
    %cst = arith.constant dense<0.000000e+00> : vector<56x32xf32>
    %2 = tpu.matmul %0, %1, %cst {dimension_numbers = #tpu.dot_dimension_numbers<[1], [0], [0], [1], [0, 0, 1, 1], [], []>} : vector<56x8xf32>, vector<8x32xf32>, vector<56x32xf32> -> vector<56x32xf32>
    %cst_3 = arith.constant dense<0.000000e+00> : vector<32xf32>
    %3 = vector.multi_reduction <add>, %2, %cst_3 [0] : vector<56x32xf32> to vector<32xf32>
    %4 = vector.shape_cast %3 : vector<32xf32> to vector<1x32xf32>
    %cst_4 = arith.constant 5.600000e+01 : f32
    %5 = vector.broadcast %cst_4 : f32 to vector<1x32xf32>
    %6 = arith.divf %4, %5 : vector<1x32xf32>
    %7 = vector.broadcast %6 : vector<1x32xf32> to vector<56x32xf32>
    %8 = arith.subf %2, %7 : vector<56x32xf32>
    %9 = arith.mulf %8, %8 : vector<56x32xf32>
    %cst_5 = arith.constant dense<0.000000e+00> : vector<32xf32>
    %10 = vector.multi_reduction <add>, %9, %cst_5 [0] : vector<56x32xf32> to vector<32xf32>
    %11 = vector.shape_cast %10 : vector<32xf32> to vector<1x32xf32>
    %cst_6 = arith.constant 5.600000e+01 : f32
    %12 = vector.broadcast %cst_6 : f32 to vector<1x32xf32>
    %13 = arith.divf %11, %12 : vector<1x32xf32>
    %14 = vector.broadcast %6 : vector<1x32xf32> to vector<56x32xf32>
    %15 = arith.subf %2, %14 : vector<56x32xf32>
    %cst_7 = arith.constant 9.99999974E-6 : f32
    %16 = vector.broadcast %cst_7 : f32 to vector<1x32xf32>
    %17 = arith.addf %13, %16 : vector<1x32xf32>
    %18 = math.rsqrt %17 : vector<1x32xf32>
    %19 = vector.broadcast %18 : vector<1x32xf32> to vector<56x32xf32>
    %20 = arith.mulf %15, %19 : vector<56x32xf32>
    %cst_8 = arith.constant 0.000000e+00 : f32
    %21 = vector.broadcast %cst_8 : f32 to vector<56x32xf32>
    %22 = arith.cmpf oge, %20, %21 : vector<56x32xf32>
    %cst_9 = arith.constant 0.00999999977 : f32
    %23 = vector.broadcast %cst_9 : f32 to vector<56x32xf32>
    %24 = arith.mulf %23, %20 : vector<56x32xf32>
    %25 = arith.select %22, %20, %24 : vector<56x32xi1>, vector<56x32xf32>
    %cst_10 = arith.constant 0.000000e+00 : f32
    %26 = vector.broadcast %cst_10 : f32 to vector<3x32xf32>
    %c0_11 = arith.constant 0 : index
    %c0_12 = arith.constant 0 : index
    %27 = vector.load %arg15[%c0_11, %c0_12] : memref<62x32xf32, #tpu.memory_space<vmem>>, vector<3x32xf32>
    tpu.vector_store %arg15[%c0_11, %c0_12], %26 {strides = array<i32>} : memref<62x32xf32, #tpu.memory_space<vmem>>, vector<3x32xf32>,
    %28 = vector.extract_strided_slice %25 {offsets = [0, 0], sizes = [28, 32], strides = [1, 1]} : vector<56x32xf32> to vector<28x32xf32>
    %c3 = arith.constant 3 : index
    %c0_13 = arith.constant 0 : index
    %29 = vector.load %arg15[%c3, %c0_13] : memref<62x32xf32, #tpu.memory_space<vmem>>, vector<28x32xf32>
    tpu.vector_store %arg15[%c3, %c0_13], %28 {strides = array<i32>} : memref<62x32xf32, #tpu.memory_space<vmem>>, vector<28x32xf32>,
    %cst_14 = arith.constant 0.000000e+00 : f32
    %30 = vector.broadcast %cst_14 : f32 to vector<3x32xf32>
    %c31 = arith.constant 31 : index
    %c0_15 = arith.constant 0 : index
    %31 = vector.load %arg15[%c31, %c0_15] : memref<62x32xf32, #tpu.memory_space<vmem>>, vector<3x32xf32>
    tpu.vector_store %arg15[%c31, %c0_15], %30 {strides = array<i32>} : memref<62x32xf32, #tpu.memory_space<vmem>>, vector<3x32xf32>,
    %32 = vector.extract_strided_slice %25 {offsets = [28, 0], sizes = [28, 32], strides = [1, 1]} : vector<56x32xf32> to vector<28x32xf32>
    %c34 = arith.constant 34 : index
    %c0_16 = arith.constant 0 : index
    %33 = vector.load %arg15[%c34, %c0_16] : memref<62x32xf32, #tpu.memory_space<vmem>>, vector<28x32xf32>
    tpu.vector_store %arg15[%c34, %c0_16], %32 {strides = array<i32>} : memref<62x32xf32, #tpu.memory_space<vmem>>, vector<28x32xf32>,
    %c0_17 = arith.constant 0 : index
    %c0_18 = arith.constant 0 : index
    %34 = tpu.strided_load %arg15[%c0_17, %c0_18] {strides = array<i32: 2, 1>} : memref<62x32xf32, #tpu.memory_space<vmem>>, vector<14x32xf32>
    %c1 = arith.constant 1 : index
    %c0_19 = arith.constant 0 : index
    %35 = tpu.strided_load %arg15[%c1, %c0_19] {strides = array<i32: 2, 1>} : memref<62x32xf32, #tpu.memory_space<vmem>>, vector<14x32xf32>
    %c2 = arith.constant 2 : index
    %c0_20 = arith.constant 0 : index
    %36 = tpu.strided_load %arg15[%c2, %c0_20] {strides = array<i32: 2, 1>} : memref<62x32xf32, #tpu.memory_space<vmem>>, vector<14x32xf32>
    %c3_21 = arith.constant 3 : index
    %c0_22 = arith.constant 0 : index
    %37 = tpu.strided_load %arg15[%c3_21, %c0_22] {strides = array<i32: 2, 1>} : memref<62x32xf32, #tpu.memory_space<vmem>>, vector<14x32xf32>
    %38 = tpu.concatenate %34, %35, %36, %37 in 1 : vector<14x32xf32>, vector<14x32xf32>, vector<14x32xf32>, vector<14x32xf32> -> vector<14x128xf32>
    %c31_23 = arith.constant 31 : index
    %c0_24 = arith.constant 0 : index
    %39 = tpu.strided_load %arg15[%c31_23, %c0_24] {strides = array<i32: 2, 1>} : memref<62x32xf32, #tpu.memory_space<vmem>>, vector<14x32xf32>
    %c32 = arith.constant 32 : index
    %c0_25 = arith.constant 0 : index
    %40 = tpu.strided_load %arg15[%c32, %c0_25] {strides = array<i32: 2, 1>} : memref<62x32xf32, #tpu.memory_space<vmem>>, vector<14x32xf32>
    %c33 = arith.constant 33 : index
    %c0_26 = arith.constant 0 : index
    %41 = tpu.strided_load %arg15[%c33, %c0_26] {strides = array<i32: 2, 1>} : memref<62x32xf32, #tpu.memory_space<vmem>>, vector<14x32xf32>
    %c34_27 = arith.constant 34 : index
    %c0_28 = arith.constant 0 : index
    %42 = tpu.strided_load %arg15[%c34_27, %c0_28] {strides = array<i32: 2, 1>} : memref<62x32xf32, #tpu.memory_space<vmem>>, vector<14x32xf32>
    %43 = tpu.concatenate %39, %40, %41, %42 in 1 : vector<14x32xf32>, vector<14x32xf32>, vector<14x32xf32>, vector<14x32xf32> -> vector<14x128xf32>
    %44 = tpu.concatenate %38, %43 in 0 : vector<14x128xf32>, vector<14x128xf32> -> vector<28x128xf32>
    %c0_29 = arith.constant 0 : index
    %c0_30 = arith.constant 0 : index
    %45 = vector.load %arg2[%c0_29, %c0_30] : memref<128x32xf32, #tpu.memory_space<vmem>>, vector<128x32xf32>
    %cst_31 = arith.constant dense<0.000000e+00> : vector<28x32xf32>
    %46 = tpu.matmul %44, %45, %cst_31 {dimension_numbers = #tpu.dot_dimension_numbers<[1], [0], [0], [1], [0, 0, 1, 1], [], []>} : vector<28x128xf32>, vector<128x32xf32>, vector<28x32xf32> -> vector<28x32xf32>
    %cst_32 = arith.constant dense<0.000000e+00> : vector<32xf32>
    %47 = vector.multi_reduction <add>, %46, %cst_32 [0] : vector<28x32xf32> to vector<32xf32>
    %48 = vector.shape_cast %47 : vector<32xf32> to vector<1x32xf32>
    %cst_33 = arith.constant 2.800000e+01 : f32
    %49 = vector.broadcast %cst_33 : f32 to vector<1x32xf32>
    %50 = arith.divf %48, %49 : vector<1x32xf32>
    %51 = vector.broadcast %50 : vector<1x32xf32> to vector<28x32xf32>
    %52 = arith.subf %46, %51 : vector<28x32xf32>
    %53 = arith.mulf %52, %52 : vector<28x32xf32>
    %cst_34 = arith.constant dense<0.000000e+00> : vector<32xf32>
    %54 = vector.multi_reduction <add>, %53, %cst_34 [0] : vector<28x32xf32> to vector<32xf32>
    %55 = vector.shape_cast %54 : vector<32xf32> to vector<1x32xf32>
    %cst_35 = arith.constant 2.800000e+01 : f32
    %56 = vector.broadcast %cst_35 : f32 to vector<1x32xf32>
    %57 = arith.divf %55, %56 : vector<1x32xf32>
    %58 = vector.broadcast %50 : vector<1x32xf32> to vector<28x32xf32>
    %59 = arith.subf %46, %58 : vector<28x32xf32>
    %cst_36 = arith.constant 9.99999974E-6 : f32
    %60 = vector.broadcast %cst_36 : f32 to vector<1x32xf32>
    %61 = arith.addf %57, %60 : vector<1x32xf32>
    %62 = math.rsqrt %61 : vector<1x32xf32>
    %63 = vector.broadcast %62 : vector<1x32xf32> to vector<28x32xf32>
    %64 = arith.mulf %59, %63 : vector<28x32xf32>
    %cst_37 = arith.constant 0.000000e+00 : f32
    %65 = vector.broadcast %cst_37 : f32 to vector<28x32xf32>
    %66 = arith.cmpf oge, %64, %65 : vector<28x32xf32>
    %cst_38 = arith.constant 0.00999999977 : f32
    %67 = vector.broadcast %cst_38 : f32 to vector<28x32xf32>
    %68 = arith.mulf %67, %64 : vector<28x32xf32>
    %69 = arith.select %66, %64, %68 : vector<28x32xi1>, vector<28x32xf32>
    %cst_39 = arith.constant 0.000000e+00 : f32
    %70 = vector.broadcast %cst_39 : f32 to vector<2x32xf32>
    %c0_40 = arith.constant 0 : index
    %c0_41 = arith.constant 0 : index
    %71 = vector.load %arg16[%c0_40, %c0_41] : memref<32x32xf32, #tpu.memory_space<vmem>>, vector<2x32xf32>
    tpu.vector_store %arg16[%c0_40, %c0_41], %70 {strides = array<i32>} : memref<32x32xf32, #tpu.memory_space<vmem>>, vector<2x32xf32>,
    %72 = vector.extract_strided_slice %69 {offsets = [0, 0], sizes = [14, 32], strides = [1, 1]} : vector<28x32xf32> to vector<14x32xf32>
    %c2_42 = arith.constant 2 : index
    %c0_43 = arith.constant 0 : index
    %73 = vector.load %arg16[%c2_42, %c0_43] : memref<32x32xf32, #tpu.memory_space<vmem>>, vector<14x32xf32>
    tpu.vector_store %arg16[%c2_42, %c0_43], %72 {strides = array<i32>} : memref<32x32xf32, #tpu.memory_space<vmem>>, vector<14x32xf32>,
    %cst_44 = arith.constant 0.000000e+00 : f32
    %74 = vector.broadcast %cst_44 : f32 to vector<2x32xf32>
    %c16 = arith.constant 16 : index
    %c0_45 = arith.constant 0 : index
    %75 = vector.load %arg16[%c16, %c0_45] : memref<32x32xf32, #tpu.memory_space<vmem>>, vector<2x32xf32>
    tpu.vector_store %arg16[%c16, %c0_45], %74 {strides = array<i32>} : memref<32x32xf32, #tpu.memory_space<vmem>>, vector<2x32xf32>,
    %76 = vector.extract_strided_slice %69 {offsets = [14, 0], sizes = [14, 32], strides = [1, 1]} : vector<28x32xf32> to vector<14x32xf32>
    %c18 = arith.constant 18 : index
    %c0_46 = arith.constant 0 : index
    %77 = vector.load %arg16[%c18, %c0_46] : memref<32x32xf32, #tpu.memory_space<vmem>>, vector<14x32xf32>
    tpu.vector_store %arg16[%c18, %c0_46], %76 {strides = array<i32>} : memref<32x32xf32, #tpu.memory_space<vmem>>, vector<14x32xf32>,
    %c0_47 = arith.constant 0 : index
    %c0_48 = arith.constant 0 : index
    %78 = vector.load %arg16[%c0_47, %c0_48] : memref<32x32xf32, #tpu.memory_space<vmem>>, vector<14x32xf32>
    %c1_49 = arith.constant 1 : index
    %c0_50 = arith.constant 0 : index
    %79 = vector.load %arg16[%c1_49, %c0_50] : memref<32x32xf32, #tpu.memory_space<vmem>>, vector<14x32xf32>
    %c2_51 = arith.constant 2 : index
    %c0_52 = arith.constant 0 : index
    %80 = vector.load %arg16[%c2_51, %c0_52] : memref<32x32xf32, #tpu.memory_space<vmem>>, vector<14x32xf32>
    %81 = tpu.concatenate %78, %79, %80 in 1 : vector<14x32xf32>, vector<14x32xf32>, vector<14x32xf32> -> vector<14x96xf32>
    %c16_53 = arith.constant 16 : index
    %c0_54 = arith.constant 0 : index
    %82 = vector.load %arg16[%c16_53, %c0_54] : memref<32x32xf32, #tpu.memory_space<vmem>>, vector<14x32xf32>
    %c17 = arith.constant 17 : index
    %c0_55 = arith.constant 0 : index
    %83 = vector.load %arg16[%c17, %c0_55] : memref<32x32xf32, #tpu.memory_space<vmem>>, vector<14x32xf32>
    %c18_56 = arith.constant 18 : index
    %c0_57 = arith.constant 0 : index
    %84 = vector.load %arg16[%c18_56, %c0_57] : memref<32x32xf32, #tpu.memory_space<vmem>>, vector<14x32xf32>
    %85 = tpu.concatenate %82, %83, %84 in 1 : vector<14x32xf32>, vector<14x32xf32>, vector<14x32xf32> -> vector<14x96xf32>
    %86 = tpu.concatenate %81, %85 in 0 : vector<14x96xf32>, vector<14x96xf32> -> vector<28x96xf32>
    %c0_58 = arith.constant 0 : index
    %c0_59 = arith.constant 0 : index
    %87 = vector.load %arg3[%c0_58, %c0_59] : memref<96x32xf32, #tpu.memory_space<vmem>>, vector<96x32xf32>
    %cst_60 = arith.constant dense<0.000000e+00> : vector<28x32xf32>
    %88 = tpu.matmul %86, %87, %cst_60 {dimension_numbers = #tpu.dot_dimension_numbers<[1], [0], [0], [1], [0, 0, 1, 1], [], []>} : vector<28x96xf32>, vector<96x32xf32>, vector<28x32xf32> -> vector<28x32xf32>
    %cst_61 = arith.constant dense<0.000000e+00> : vector<32xf32>
    %89 = vector.multi_reduction <add>, %88, %cst_61 [0] : vector<28x32xf32> to vector<32xf32>
    %90 = vector.shape_cast %89 : vector<32xf32> to vector<1x32xf32>
    %cst_62 = arith.constant 2.800000e+01 : f32
    %91 = vector.broadcast %cst_62 : f32 to vector<1x32xf32>
    %92 = arith.divf %90, %91 : vector<1x32xf32>
    %93 = vector.broadcast %92 : vector<1x32xf32> to vector<28x32xf32>
    %94 = arith.subf %88, %93 : vector<28x32xf32>
    %95 = arith.mulf %94, %94 : vector<28x32xf32>
    %cst_63 = arith.constant dense<0.000000e+00> : vector<32xf32>
    %96 = vector.multi_reduction <add>, %95, %cst_63 [0] : vector<28x32xf32> to vector<32xf32>
    %97 = vector.shape_cast %96 : vector<32xf32> to vector<1x32xf32>
    %cst_64 = arith.constant 2.800000e+01 : f32
    %98 = vector.broadcast %cst_64 : f32 to vector<1x32xf32>
    %99 = arith.divf %97, %98 : vector<1x32xf32>
    %100 = vector.broadcast %92 : vector<1x32xf32> to vector<28x32xf32>
    %101 = arith.subf %88, %100 : vector<28x32xf32>
    %cst_65 = arith.constant 9.99999974E-6 : f32
    %102 = vector.broadcast %cst_65 : f32 to vector<1x32xf32>
    %103 = arith.addf %99, %102 : vector<1x32xf32>
    %104 = math.rsqrt %103 : vector<1x32xf32>
    %105 = vector.broadcast %104 : vector<1x32xf32> to vector<28x32xf32>
    %106 = arith.mulf %101, %105 : vector<28x32xf32>
    %cst_66 = arith.constant 0.000000e+00 : f32
    %107 = vector.broadcast %cst_66 : f32 to vector<28x32xf32>
    %108 = arith.cmpf oge, %106, %107 : vector<28x32xf32>
    %cst_67 = arith.constant 0.00999999977 : f32
    %109 = vector.broadcast %cst_67 : f32 to vector<28x32xf32>
    %110 = arith.mulf %109, %106 : vector<28x32xf32>
    %111 = arith.select %108, %106, %110 : vector<28x32xi1>, vector<28x32xf32>
    %cst_68 = arith.constant 0.000000e+00 : f32
    %112 = vector.broadcast %cst_68 : f32 to vector<3x32xf32>
    %c0_69 = arith.constant 0 : index
    %c0_70 = arith.constant 0 : index
    %113 = vector.load %arg17[%c0_69, %c0_70] : memref<34x32xf32, #tpu.memory_space<vmem>>, vector<3x32xf32>
    tpu.vector_store %arg17[%c0_69, %c0_70], %112 {strides = array<i32>} : memref<34x32xf32, #tpu.memory_space<vmem>>, vector<3x32xf32>,
    %114 = vector.extract_strided_slice %111 {offsets = [0, 0], sizes = [14, 32], strides = [1, 1]} : vector<28x32xf32> to vector<14x32xf32>
    %c3_71 = arith.constant 3 : index
    %c0_72 = arith.constant 0 : index
    %115 = vector.load %arg17[%c3_71, %c0_72] : memref<34x32xf32, #tpu.memory_space<vmem>>, vector<14x32xf32>
    tpu.vector_store %arg17[%c3_71, %c0_72], %114 {strides = array<i32>} : memref<34x32xf32, #tpu.memory_space<vmem>>, vector<14x32xf32>,
    %cst_73 = arith.constant 0.000000e+00 : f32
    %116 = vector.broadcast %cst_73 : f32 to vector<3x32xf32>
    %c17_74 = arith.constant 17 : index
    %c0_75 = arith.constant 0 : index
    %117 = vector.load %arg17[%c17_74, %c0_75] : memref<34x32xf32, #tpu.memory_space<vmem>>, vector<3x32xf32>
    tpu.vector_store %arg17[%c17_74, %c0_75], %116 {strides = array<i32>} : memref<34x32xf32, #tpu.memory_space<vmem>>, vector<3x32xf32>,
    %118 = vector.extract_strided_slice %111 {offsets = [14, 0], sizes = [14, 32], strides = [1, 1]} : vector<28x32xf32> to vector<14x32xf32>
    %c20 = arith.constant 20 : index
    %c0_76 = arith.constant 0 : index
    %119 = vector.load %arg17[%c20, %c0_76] : memref<34x32xf32, #tpu.memory_space<vmem>>, vector<14x32xf32>
    tpu.vector_store %arg17[%c20, %c0_76], %118 {strides = array<i32>} : memref<34x32xf32, #tpu.memory_space<vmem>>, vector<14x32xf32>,
    %c0_77 = arith.constant 0 : index
    %c0_78 = arith.constant 0 : index
    %120 = vector.load %arg17[%c0_77, %c0_78] : memref<34x32xf32, #tpu.memory_space<vmem>>, vector<14x32xf32>
    %c1_79 = arith.constant 1 : index
    %c0_80 = arith.constant 0 : index
    %121 = vector.load %arg17[%c1_79, %c0_80] : memref<34x32xf32, #tpu.memory_space<vmem>>, vector<14x32xf32>
    %c2_81 = arith.constant 2 : index
    %c0_82 = arith.constant 0 : index
    %122 = vector.load %arg17[%c2_81, %c0_82] : memref<34x32xf32, #tpu.memory_space<vmem>>, vector<14x32xf32>
    %c3_83 = arith.constant 3 : index
    %c0_84 = arith.constant 0 : index
    %123 = vector.load %arg17[%c3_83, %c0_84] : memref<34x32xf32, #tpu.memory_space<vmem>>, vector<14x32xf32>
    %124 = tpu.concatenate %120, %121, %122, %123 in 1 : vector<14x32xf32>, vector<14x32xf32>, vector<14x32xf32>, vector<14x32xf32> -> vector<14x128xf32>
    %c17_85 = arith.constant 17 : index
    %c0_86 = arith.constant 0 : index
    %125 = vector.load %arg17[%c17_85, %c0_86] : memref<34x32xf32, #tpu.memory_space<vmem>>, vector<14x32xf32>
    %c18_87 = arith.constant 18 : index
    %c0_88 = arith.constant 0 : index
    %126 = vector.load %arg17[%c18_87, %c0_88] : memref<34x32xf32, #tpu.memory_space<vmem>>, vector<14x32xf32>
    %c19 = arith.constant 19 : index
    %c0_89 = arith.constant 0 : index
    %127 = vector.load %arg17[%c19, %c0_89] : memref<34x32xf32, #tpu.memory_space<vmem>>, vector<14x32xf32>
    %c20_90 = arith.constant 20 : index
    %c0_91 = arith.constant 0 : index
    %128 = vector.load %arg17[%c20_90, %c0_91] : memref<34x32xf32, #tpu.memory_space<vmem>>, vector<14x32xf32>
    %129 = tpu.concatenate %125, %126, %127, %128 in 1 : vector<14x32xf32>, vector<14x32xf32>, vector<14x32xf32>, vector<14x32xf32> -> vector<14x128xf32>
    %130 = tpu.concatenate %124, %129 in 0 : vector<14x128xf32>, vector<14x128xf32> -> vector<28x128xf32>
    %c0_92 = arith.constant 0 : index
    %c0_93 = arith.constant 0 : index
    %131 = vector.load %arg4[%c0_92, %c0_93] : memref<128x32xf32, #tpu.memory_space<vmem>>, vector<128x32xf32>
    %cst_94 = arith.constant dense<0.000000e+00> : vector<28x32xf32>
    %132 = tpu.matmul %130, %131, %cst_94 {dimension_numbers = #tpu.dot_dimension_numbers<[1], [0], [0], [1], [0, 0, 1, 1], [], []>} : vector<28x128xf32>, vector<128x32xf32>, vector<28x32xf32> -> vector<28x32xf32>
    %cst_95 = arith.constant dense<0.000000e+00> : vector<32xf32>
    %133 = vector.multi_reduction <add>, %132, %cst_95 [0] : vector<28x32xf32> to vector<32xf32>
    %134 = vector.shape_cast %133 : vector<32xf32> to vector<1x32xf32>
    %cst_96 = arith.constant 2.800000e+01 : f32
    %135 = vector.broadcast %cst_96 : f32 to vector<1x32xf32>
    %136 = arith.divf %134, %135 : vector<1x32xf32>
    %137 = vector.broadcast %136 : vector<1x32xf32> to vector<28x32xf32>
    %138 = arith.subf %132, %137 : vector<28x32xf32>
    %139 = arith.mulf %138, %138 : vector<28x32xf32>
    %cst_97 = arith.constant dense<0.000000e+00> : vector<32xf32>
    %140 = vector.multi_reduction <add>, %139, %cst_97 [0] : vector<28x32xf32> to vector<32xf32>
    %141 = vector.shape_cast %140 : vector<32xf32> to vector<1x32xf32>
    %cst_98 = arith.constant 2.800000e+01 : f32
    %142 = vector.broadcast %cst_98 : f32 to vector<1x32xf32>
    %143 = arith.divf %141, %142 : vector<1x32xf32>
    %144 = vector.broadcast %136 : vector<1x32xf32> to vector<28x32xf32>
    %145 = arith.subf %132, %144 : vector<28x32xf32>
    %cst_99 = arith.constant 9.99999974E-6 : f32
    %146 = vector.broadcast %cst_99 : f32 to vector<1x32xf32>
    %147 = arith.addf %143, %146 : vector<1x32xf32>
    %148 = math.rsqrt %147 : vector<1x32xf32>
    %149 = vector.broadcast %148 : vector<1x32xf32> to vector<28x32xf32>
    %150 = arith.mulf %145, %149 : vector<28x32xf32>
    %cst_100 = arith.constant 0.000000e+00 : f32
    %151 = vector.broadcast %cst_100 : f32 to vector<28x32xf32>
    %152 = arith.cmpf oge, %150, %151 : vector<28x32xf32>
    %cst_101 = arith.constant 0.00999999977 : f32
    %153 = vector.broadcast %cst_101 : f32 to vector<28x32xf32>
    %154 = arith.mulf %153, %150 : vector<28x32xf32>
    %155 = arith.select %152, %150, %154 : vector<28x32xi1>, vector<28x32xf32>
    %c0_102 = arith.constant 0 : index
    %c0_103 = arith.constant 0 : index
    %156 = vector.load %arg5[%c0_102, %c0_103] : memref<32x48xf32, #tpu.memory_space<vmem>>, vector<32x48xf32>
    %cst_104 = arith.constant dense<0.000000e+00> : vector<28x48xf32>
    %157 = tpu.matmul %155, %156, %cst_104 {dimension_numbers = #tpu.dot_dimension_numbers<[1], [0], [0], [1], [0, 0, 1, 1], [], []>} : vector<28x32xf32>, vector<32x48xf32>, vector<28x48xf32> -> vector<28x48xf32>
    %c0_105 = arith.constant 0 : index
    %c0_106 = arith.constant 0 : index
    %158 = vector.load %arg7[%c0_105, %c0_106] : memref<1x48xf32, #tpu.memory_space<vmem>>, vector<1x48xf32>
    %159 = vector.broadcast %158 : vector<1x48xf32> to vector<28x48xf32>
    %160 = arith.addf %157, %159 : vector<28x48xf32>
    %c0_107 = arith.constant 0 : index
    %c0_108 = arith.constant 0 : index
    %161 = vector.load %arg6[%c0_107, %c0_108] : memref<16x48xf32, #tpu.memory_space<vmem>>, vector<16x48xf32>
    %c0_109 = arith.constant 0 : index
    %c0_110 = arith.constant 0 : index
    %162 = vector.load %arg8[%c0_109, %c0_110] : memref<1x48xf32, #tpu.memory_space<vmem>>, vector<1x48xf32>
    %c0_111 = arith.constant 0 : index
    %c0_112 = arith.constant 0 : index
    %163 = vector.load %arg9[%c0_111, %c0_112] : memref<2x16xf32, #tpu.memory_space<vmem>>, vector<2x16xf32>
    %164 = vector.extract_strided_slice %160 {offsets = [0, 0], sizes = [1, 48], strides = [1, 1]} : vector<28x48xf32> to vector<1x48xf32>
    %165 = vector.extract_strided_slice %160 {offsets = [14, 0], sizes = [1, 48], strides = [1, 1]} : vector<28x48xf32> to vector<1x48xf32>
    %166 = tpu.concatenate %164, %165 in 0 : vector<1x48xf32>, vector<1x48xf32> -> vector<2x48xf32>
    %cst_113 = arith.constant dense<0.000000e+00> : vector<2x48xf32>
    %167 = tpu.matmul %163, %161, %cst_113 {dimension_numbers = #tpu.dot_dimension_numbers<[1], [0], [0], [1], [0, 0, 1, 1], [], []>} : vector<2x16xf32>, vector<16x48xf32>, vector<2x48xf32> -> vector<2x48xf32>
    %168 = vector.broadcast %162 : vector<1x48xf32> to vector<2x48xf32>
    %169 = arith.addf %167, %168 : vector<2x48xf32>
    %170 = vector.extract_strided_slice %166 {offsets = [0, 0], sizes = [2, 16], strides = [1, 1]} : vector<2x48xf32> to vector<2x16xf32>
    %171 = vector.extract_strided_slice %169 {offsets = [0, 0], sizes = [2, 16], strides = [1, 1]} : vector<2x48xf32> to vector<2x16xf32>
    %172 = arith.addf %170, %171 : vector<2x16xf32>
    %173 = arith.negf %172 : vector<2x16xf32>
    %174 = math.exp %173 : vector<2x16xf32>
    %cst_114 = arith.constant 1.000000e+00 : f32
    %175 = vector.broadcast %cst_114 : f32 to vector<2x16xf32>
    %176 = arith.addf %175, %174 : vector<2x16xf32>
    %177 = arith.divf %175, %176 : vector<2x16xf32>
    %178 = vector.extract_strided_slice %166 {offsets = [0, 16], sizes = [2, 16], strides = [1, 1]} : vector<2x48xf32> to vector<2x16xf32>
    %179 = vector.extract_strided_slice %169 {offsets = [0, 16], sizes = [2, 16], strides = [1, 1]} : vector<2x48xf32> to vector<2x16xf32>
    %180 = arith.addf %178, %179 : vector<2x16xf32>
    %181 = arith.negf %180 : vector<2x16xf32>
    %182 = math.exp %181 : vector<2x16xf32>
    %cst_115 = arith.constant 1.000000e+00 : f32
    %183 = vector.broadcast %cst_115 : f32 to vector<2x16xf32>
    %184 = arith.addf %183, %182 : vector<2x16xf32>
    %185 = arith.divf %183, %184 : vector<2x16xf32>
    %186 = vector.extract_strided_slice %166 {offsets = [0, 32], sizes = [2, 16], strides = [1, 1]} : vector<2x48xf32> to vector<2x16xf32>
    %187 = vector.extract_strided_slice %169 {offsets = [0, 32], sizes = [2, 16], strides = [1, 1]} : vector<2x48xf32> to vector<2x16xf32>
    %188 = arith.mulf %177, %187 : vector<2x16xf32>
    %189 = arith.addf %186, %188 : vector<2x16xf32>
    %190 = math.tanh %189 : vector<2x16xf32>
    %cst_116 = arith.constant 1.000000e+00 : f32
    %191 = vector.broadcast %cst_116 : f32 to vector<2x16xf32>
    %192 = arith.subf %191, %185 : vector<2x16xf32>
    %193 = arith.mulf %192, %190 : vector<2x16xf32>
    %194 = arith.mulf %185, %163 : vector<2x16xf32>
    %195 = arith.addf %193, %194 : vector<2x16xf32>
    %196 = vector.extract_strided_slice %160 {offsets = [1, 0], sizes = [1, 48], strides = [1, 1]} : vector<28x48xf32> to vector<1x48xf32>
    %197 = vector.extract_strided_slice %160 {offsets = [15, 0], sizes = [1, 48], strides = [1, 1]} : vector<28x48xf32> to vector<1x48xf32>
    %198 = tpu.concatenate %196, %197 in 0 : vector<1x48xf32>, vector<1x48xf32> -> vector<2x48xf32>
    %cst_117 = arith.constant dense<0.000000e+00> : vector<2x48xf32>
    %199 = tpu.matmul %195, %161, %cst_117 {dimension_numbers = #tpu.dot_dimension_numbers<[1], [0], [0], [1], [0, 0, 1, 1], [], []>} : vector<2x16xf32>, vector<16x48xf32>, vector<2x48xf32> -> vector<2x48xf32>
    %200 = vector.broadcast %162 : vector<1x48xf32> to vector<2x48xf32>
    %201 = arith.addf %199, %200 : vector<2x48xf32>
    %202 = vector.extract_strided_slice %198 {offsets = [0, 0], sizes = [2, 16], strides = [1, 1]} : vector<2x48xf32> to vector<2x16xf32>
    %203 = vector.extract_strided_slice %201 {offsets = [0, 0], sizes = [2, 16], strides = [1, 1]} : vector<2x48xf32> to vector<2x16xf32>
    %204 = arith.addf %202, %203 : vector<2x16xf32>
    %205 = arith.negf %204 : vector<2x16xf32>
    %206 = math.exp %205 : vector<2x16xf32>
    %cst_118 = arith.constant 1.000000e+00 : f32
    %207 = vector.broadcast %cst_118 : f32 to vector<2x16xf32>
    %208 = arith.addf %207, %206 : vector<2x16xf32>
    %209 = arith.divf %207, %208 : vector<2x16xf32>
    %210 = vector.extract_strided_slice %198 {offsets = [0, 16], sizes = [2, 16], strides = [1, 1]} : vector<2x48xf32> to vector<2x16xf32>
    %211 = vector.extract_strided_slice %201 {offsets = [0, 16], sizes = [2, 16], strides = [1, 1]} : vector<2x48xf32> to vector<2x16xf32>
    %212 = arith.addf %210, %211 : vector<2x16xf32>
    %213 = arith.negf %212 : vector<2x16xf32>
    %214 = math.exp %213 : vector<2x16xf32>
    %cst_119 = arith.constant 1.000000e+00 : f32
    %215 = vector.broadcast %cst_119 : f32 to vector<2x16xf32>
    %216 = arith.addf %215, %214 : vector<2x16xf32>
    %217 = arith.divf %215, %216 : vector<2x16xf32>
    %218 = vector.extract_strided_slice %198 {offsets = [0, 32], sizes = [2, 16], strides = [1, 1]} : vector<2x48xf32> to vector<2x16xf32>
    %219 = vector.extract_strided_slice %201 {offsets = [0, 32], sizes = [2, 16], strides = [1, 1]} : vector<2x48xf32> to vector<2x16xf32>
    %220 = arith.mulf %209, %219 : vector<2x16xf32>
    %221 = arith.addf %218, %220 : vector<2x16xf32>
    %222 = math.tanh %221 : vector<2x16xf32>
    %cst_120 = arith.constant 1.000000e+00 : f32
    %223 = vector.broadcast %cst_120 : f32 to vector<2x16xf32>
    %224 = arith.subf %223, %217 : vector<2x16xf32>
    %225 = arith.mulf %224, %222 : vector<2x16xf32>
    %226 = arith.mulf %217, %195 : vector<2x16xf32>
    %227 = arith.addf %225, %226 : vector<2x16xf32>
    %228 = vector.extract_strided_slice %160 {offsets = [2, 0], sizes = [1, 48], strides = [1, 1]} : vector<28x48xf32> to vector<1x48xf32>
    %229 = vector.extract_strided_slice %160 {offsets = [16, 0], sizes = [1, 48], strides = [1, 1]} : vector<28x48xf32> to vector<1x48xf32>
    %230 = tpu.concatenate %228, %229 in 0 : vector<1x48xf32>, vector<1x48xf32> -> vector<2x48xf32>
    %cst_121 = arith.constant dense<0.000000e+00> : vector<2x48xf32>
    %231 = tpu.matmul %227, %161, %cst_121 {dimension_numbers = #tpu.dot_dimension_numbers<[1], [0], [0], [1], [0, 0, 1, 1], [], []>} : vector<2x16xf32>, vector<16x48xf32>, vector<2x48xf32> -> vector<2x48xf32>
    %232 = vector.broadcast %162 : vector<1x48xf32> to vector<2x48xf32>
    %233 = arith.addf %231, %232 : vector<2x48xf32>
    %234 = vector.extract_strided_slice %230 {offsets = [0, 0], sizes = [2, 16], strides = [1, 1]} : vector<2x48xf32> to vector<2x16xf32>
    %235 = vector.extract_strided_slice %233 {offsets = [0, 0], sizes = [2, 16], strides = [1, 1]} : vector<2x48xf32> to vector<2x16xf32>
    %236 = arith.addf %234, %235 : vector<2x16xf32>
    %237 = arith.negf %236 : vector<2x16xf32>
    %238 = math.exp %237 : vector<2x16xf32>
    %cst_122 = arith.constant 1.000000e+00 : f32
    %239 = vector.broadcast %cst_122 : f32 to vector<2x16xf32>
    %240 = arith.addf %239, %238 : vector<2x16xf32>
    %241 = arith.divf %239, %240 : vector<2x16xf32>
    %242 = vector.extract_strided_slice %230 {offsets = [0, 16], sizes = [2, 16], strides = [1, 1]} : vector<2x48xf32> to vector<2x16xf32>
    %243 = vector.extract_strided_slice %233 {offsets = [0, 16], sizes = [2, 16], strides = [1, 1]} : vector<2x48xf32> to vector<2x16xf32>
    %244 = arith.addf %242, %243 : vector<2x16xf32>
    %245 = arith.negf %244 : vector<2x16xf32>
    %246 = math.exp %245 : vector<2x16xf32>
    %cst_123 = arith.constant 1.000000e+00 : f32
    %247 = vector.broadcast %cst_123 : f32 to vector<2x16xf32>
    %248 = arith.addf %247, %246 : vector<2x16xf32>
    %249 = arith.divf %247, %248 : vector<2x16xf32>
    %250 = vector.extract_strided_slice %230 {offsets = [0, 32], sizes = [2, 16], strides = [1, 1]} : vector<2x48xf32> to vector<2x16xf32>
    %251 = vector.extract_strided_slice %233 {offsets = [0, 32], sizes = [2, 16], strides = [1, 1]} : vector<2x48xf32> to vector<2x16xf32>
    %252 = arith.mulf %241, %251 : vector<2x16xf32>
    %253 = arith.addf %250, %252 : vector<2x16xf32>
    %254 = math.tanh %253 : vector<2x16xf32>
    %cst_124 = arith.constant 1.000000e+00 : f32
    %255 = vector.broadcast %cst_124 : f32 to vector<2x16xf32>
    %256 = arith.subf %255, %249 : vector<2x16xf32>
    %257 = arith.mulf %256, %254 : vector<2x16xf32>
    %258 = arith.mulf %249, %227 : vector<2x16xf32>
    %259 = arith.addf %257, %258 : vector<2x16xf32>
    %260 = vector.extract_strided_slice %160 {offsets = [3, 0], sizes = [1, 48], strides = [1, 1]} : vector<28x48xf32> to vector<1x48xf32>
    %261 = vector.extract_strided_slice %160 {offsets = [17, 0], sizes = [1, 48], strides = [1, 1]} : vector<28x48xf32> to vector<1x48xf32>
    %262 = tpu.concatenate %260, %261 in 0 : vector<1x48xf32>, vector<1x48xf32> -> vector<2x48xf32>
    %cst_125 = arith.constant dense<0.000000e+00> : vector<2x48xf32>
    %263 = tpu.matmul %259, %161, %cst_125 {dimension_numbers = #tpu.dot_dimension_numbers<[1], [0], [0], [1], [0, 0, 1, 1], [], []>} : vector<2x16xf32>, vector<16x48xf32>, vector<2x48xf32> -> vector<2x48xf32>
    %264 = vector.broadcast %162 : vector<1x48xf32> to vector<2x48xf32>
    %265 = arith.addf %263, %264 : vector<2x48xf32>
    %266 = vector.extract_strided_slice %262 {offsets = [0, 0], sizes = [2, 16], strides = [1, 1]} : vector<2x48xf32> to vector<2x16xf32>
    %267 = vector.extract_strided_slice %265 {offsets = [0, 0], sizes = [2, 16], strides = [1, 1]} : vector<2x48xf32> to vector<2x16xf32>
    %268 = arith.addf %266, %267 : vector<2x16xf32>
    %269 = arith.negf %268 : vector<2x16xf32>
    %270 = math.exp %269 : vector<2x16xf32>
    %cst_126 = arith.constant 1.000000e+00 : f32
    %271 = vector.broadcast %cst_126 : f32 to vector<2x16xf32>
    %272 = arith.addf %271, %270 : vector<2x16xf32>
    %273 = arith.divf %271, %272 : vector<2x16xf32>
    %274 = vector.extract_strided_slice %262 {offsets = [0, 16], sizes = [2, 16], strides = [1, 1]} : vector<2x48xf32> to vector<2x16xf32>
    %275 = vector.extract_strided_slice %265 {offsets = [0, 16], sizes = [2, 16], strides = [1, 1]} : vector<2x48xf32> to vector<2x16xf32>
    %276 = arith.addf %274, %275 : vector<2x16xf32>
    %277 = arith.negf %276 : vector<2x16xf32>
    %278 = math.exp %277 : vector<2x16xf32>
    %cst_127 = arith.constant 1.000000e+00 : f32
    %279 = vector.broadcast %cst_127 : f32 to vector<2x16xf32>
    %280 = arith.addf %279, %278 : vector<2x16xf32>
    %281 = arith.divf %279, %280 : vector<2x16xf32>
    %282 = vector.extract_strided_slice %262 {offsets = [0, 32], sizes = [2, 16], strides = [1, 1]} : vector<2x48xf32> to vector<2x16xf32>
    %283 = vector.extract_strided_slice %265 {offsets = [0, 32], sizes = [2, 16], strides = [1, 1]} : vector<2x48xf32> to vector<2x16xf32>
    %284 = arith.mulf %273, %283 : vector<2x16xf32>
    %285 = arith.addf %282, %284 : vector<2x16xf32>
    %286 = math.tanh %285 : vector<2x16xf32>
    %cst_128 = arith.constant 1.000000e+00 : f32
    %287 = vector.broadcast %cst_128 : f32 to vector<2x16xf32>
    %288 = arith.subf %287, %281 : vector<2x16xf32>
    %289 = arith.mulf %288, %286 : vector<2x16xf32>
    %290 = arith.mulf %281, %259 : vector<2x16xf32>
    %291 = arith.addf %289, %290 : vector<2x16xf32>
    %292 = vector.extract_strided_slice %160 {offsets = [4, 0], sizes = [1, 48], strides = [1, 1]} : vector<28x48xf32> to vector<1x48xf32>
    %293 = vector.extract_strided_slice %160 {offsets = [18, 0], sizes = [1, 48], strides = [1, 1]} : vector<28x48xf32> to vector<1x48xf32>
    %294 = tpu.concatenate %292, %293 in 0 : vector<1x48xf32>, vector<1x48xf32> -> vector<2x48xf32>
    %cst_129 = arith.constant dense<0.000000e+00> : vector<2x48xf32>
    %295 = tpu.matmul %291, %161, %cst_129 {dimension_numbers = #tpu.dot_dimension_numbers<[1], [0], [0], [1], [0, 0, 1, 1], [], []>} : vector<2x16xf32>, vector<16x48xf32>, vector<2x48xf32> -> vector<2x48xf32>
    %296 = vector.broadcast %162 : vector<1x48xf32> to vector<2x48xf32>
    %297 = arith.addf %295, %296 : vector<2x48xf32>
    %298 = vector.extract_strided_slice %294 {offsets = [0, 0], sizes = [2, 16], strides = [1, 1]} : vector<2x48xf32> to vector<2x16xf32>
    %299 = vector.extract_strided_slice %297 {offsets = [0, 0], sizes = [2, 16], strides = [1, 1]} : vector<2x48xf32> to vector<2x16xf32>
    %300 = arith.addf %298, %299 : vector<2x16xf32>
    %301 = arith.negf %300 : vector<2x16xf32>
    %302 = math.exp %301 : vector<2x16xf32>
    %cst_130 = arith.constant 1.000000e+00 : f32
    %303 = vector.broadcast %cst_130 : f32 to vector<2x16xf32>
    %304 = arith.addf %303, %302 : vector<2x16xf32>
    %305 = arith.divf %303, %304 : vector<2x16xf32>
    %306 = vector.extract_strided_slice %294 {offsets = [0, 16], sizes = [2, 16], strides = [1, 1]} : vector<2x48xf32> to vector<2x16xf32>
    %307 = vector.extract_strided_slice %297 {offsets = [0, 16], sizes = [2, 16], strides = [1, 1]} : vector<2x48xf32> to vector<2x16xf32>
    %308 = arith.addf %306, %307 : vector<2x16xf32>
    %309 = arith.negf %308 : vector<2x16xf32>
    %310 = math.exp %309 : vector<2x16xf32>
    %cst_131 = arith.constant 1.000000e+00 : f32
    %311 = vector.broadcast %cst_131 : f32 to vector<2x16xf32>
    %312 = arith.addf %311, %310 : vector<2x16xf32>
    %313 = arith.divf %311, %312 : vector<2x16xf32>
    %314 = vector.extract_strided_slice %294 {offsets = [0, 32], sizes = [2, 16], strides = [1, 1]} : vector<2x48xf32> to vector<2x16xf32>
    %315 = vector.extract_strided_slice %297 {offsets = [0, 32], sizes = [2, 16], strides = [1, 1]} : vector<2x48xf32> to vector<2x16xf32>
    %316 = arith.mulf %305, %315 : vector<2x16xf32>
    %317 = arith.addf %314, %316 : vector<2x16xf32>
    %318 = math.tanh %317 : vector<2x16xf32>
    %cst_132 = arith.constant 1.000000e+00 : f32
    %319 = vector.broadcast %cst_132 : f32 to vector<2x16xf32>
    %320 = arith.subf %319, %313 : vector<2x16xf32>
    %321 = arith.mulf %320, %318 : vector<2x16xf32>
    %322 = arith.mulf %313, %291 : vector<2x16xf32>
    %323 = arith.addf %321, %322 : vector<2x16xf32>
    %324 = vector.extract_strided_slice %160 {offsets = [5, 0], sizes = [1, 48], strides = [1, 1]} : vector<28x48xf32> to vector<1x48xf32>
    %325 = vector.extract_strided_slice %160 {offsets = [19, 0], sizes = [1, 48], strides = [1, 1]} : vector<28x48xf32> to vector<1x48xf32>
    %326 = tpu.concatenate %324, %325 in 0 : vector<1x48xf32>, vector<1x48xf32> -> vector<2x48xf32>
    %cst_133 = arith.constant dense<0.000000e+00> : vector<2x48xf32>
    %327 = tpu.matmul %323, %161, %cst_133 {dimension_numbers = #tpu.dot_dimension_numbers<[1], [0], [0], [1], [0, 0, 1, 1], [], []>} : vector<2x16xf32>, vector<16x48xf32>, vector<2x48xf32> -> vector<2x48xf32>
    %328 = vector.broadcast %162 : vector<1x48xf32> to vector<2x48xf32>
    %329 = arith.addf %327, %328 : vector<2x48xf32>
    %330 = vector.extract_strided_slice %326 {offsets = [0, 0], sizes = [2, 16], strides = [1, 1]} : vector<2x48xf32> to vector<2x16xf32>
    %331 = vector.extract_strided_slice %329 {offsets = [0, 0], sizes = [2, 16], strides = [1, 1]} : vector<2x48xf32> to vector<2x16xf32>
    %332 = arith.addf %330, %331 : vector<2x16xf32>
    %333 = arith.negf %332 : vector<2x16xf32>
    %334 = math.exp %333 : vector<2x16xf32>
    %cst_134 = arith.constant 1.000000e+00 : f32
    %335 = vector.broadcast %cst_134 : f32 to vector<2x16xf32>
    %336 = arith.addf %335, %334 : vector<2x16xf32>
    %337 = arith.divf %335, %336 : vector<2x16xf32>
    %338 = vector.extract_strided_slice %326 {offsets = [0, 16], sizes = [2, 16], strides = [1, 1]} : vector<2x48xf32> to vector<2x16xf32>
    %339 = vector.extract_strided_slice %329 {offsets = [0, 16], sizes = [2, 16], strides = [1, 1]} : vector<2x48xf32> to vector<2x16xf32>
    %340 = arith.addf %338, %339 : vector<2x16xf32>
    %341 = arith.negf %340 : vector<2x16xf32>
    %342 = math.exp %341 : vector<2x16xf32>
    %cst_135 = arith.constant 1.000000e+00 : f32
    %343 = vector.broadcast %cst_135 : f32 to vector<2x16xf32>
    %344 = arith.addf %343, %342 : vector<2x16xf32>
    %345 = arith.divf %343, %344 : vector<2x16xf32>
    %346 = vector.extract_strided_slice %326 {offsets = [0, 32], sizes = [2, 16], strides = [1, 1]} : vector<2x48xf32> to vector<2x16xf32>
    %347 = vector.extract_strided_slice %329 {offsets = [0, 32], sizes = [2, 16], strides = [1, 1]} : vector<2x48xf32> to vector<2x16xf32>
    %348 = arith.mulf %337, %347 : vector<2x16xf32>
    %349 = arith.addf %346, %348 : vector<2x16xf32>
    %350 = math.tanh %349 : vector<2x16xf32>
    %cst_136 = arith.constant 1.000000e+00 : f32
    %351 = vector.broadcast %cst_136 : f32 to vector<2x16xf32>
    %352 = arith.subf %351, %345 : vector<2x16xf32>
    %353 = arith.mulf %352, %350 : vector<2x16xf32>
    %354 = arith.mulf %345, %323 : vector<2x16xf32>
    %355 = arith.addf %353, %354 : vector<2x16xf32>
    %356 = vector.extract_strided_slice %160 {offsets = [6, 0], sizes = [1, 48], strides = [1, 1]} : vector<28x48xf32> to vector<1x48xf32>
    %357 = vector.extract_strided_slice %160 {offsets = [20, 0], sizes = [1, 48], strides = [1, 1]} : vector<28x48xf32> to vector<1x48xf32>
    %358 = tpu.concatenate %356, %357 in 0 : vector<1x48xf32>, vector<1x48xf32> -> vector<2x48xf32>
    %cst_137 = arith.constant dense<0.000000e+00> : vector<2x48xf32>
    %359 = tpu.matmul %355, %161, %cst_137 {dimension_numbers = #tpu.dot_dimension_numbers<[1], [0], [0], [1], [0, 0, 1, 1], [], []>} : vector<2x16xf32>, vector<16x48xf32>, vector<2x48xf32> -> vector<2x48xf32>
    %360 = vector.broadcast %162 : vector<1x48xf32> to vector<2x48xf32>
    %361 = arith.addf %359, %360 : vector<2x48xf32>
    %362 = vector.extract_strided_slice %358 {offsets = [0, 0], sizes = [2, 16], strides = [1, 1]} : vector<2x48xf32> to vector<2x16xf32>
    %363 = vector.extract_strided_slice %361 {offsets = [0, 0], sizes = [2, 16], strides = [1, 1]} : vector<2x48xf32> to vector<2x16xf32>
    %364 = arith.addf %362, %363 : vector<2x16xf32>
    %365 = arith.negf %364 : vector<2x16xf32>
    %366 = math.exp %365 : vector<2x16xf32>
    %cst_138 = arith.constant 1.000000e+00 : f32
    %367 = vector.broadcast %cst_138 : f32 to vector<2x16xf32>
    %368 = arith.addf %367, %366 : vector<2x16xf32>
    %369 = arith.divf %367, %368 : vector<2x16xf32>
    %370 = vector.extract_strided_slice %358 {offsets = [0, 16], sizes = [2, 16], strides = [1, 1]} : vector<2x48xf32> to vector<2x16xf32>
    %371 = vector.extract_strided_slice %361 {offsets = [0, 16], sizes = [2, 16], strides = [1, 1]} : vector<2x48xf32> to vector<2x16xf32>
    %372 = arith.addf %370, %371 : vector<2x16xf32>
    %373 = arith.negf %372 : vector<2x16xf32>
    %374 = math.exp %373 : vector<2x16xf32>
    %cst_139 = arith.constant 1.000000e+00 : f32
    %375 = vector.broadcast %cst_139 : f32 to vector<2x16xf32>
    %376 = arith.addf %375, %374 : vector<2x16xf32>
    %377 = arith.divf %375, %376 : vector<2x16xf32>
    %378 = vector.extract_strided_slice %358 {offsets = [0, 32], sizes = [2, 16], strides = [1, 1]} : vector<2x48xf32> to vector<2x16xf32>
    %379 = vector.extract_strided_slice %361 {offsets = [0, 32], sizes = [2, 16], strides = [1, 1]} : vector<2x48xf32> to vector<2x16xf32>
    %380 = arith.mulf %369, %379 : vector<2x16xf32>
    %381 = arith.addf %378, %380 : vector<2x16xf32>
    %382 = math.tanh %381 : vector<2x16xf32>
    %cst_140 = arith.constant 1.000000e+00 : f32
    %383 = vector.broadcast %cst_140 : f32 to vector<2x16xf32>
    %384 = arith.subf %383, %377 : vector<2x16xf32>
    %385 = arith.mulf %384, %382 : vector<2x16xf32>
    %386 = arith.mulf %377, %355 : vector<2x16xf32>
    %387 = arith.addf %385, %386 : vector<2x16xf32>
    %388 = vector.extract_strided_slice %160 {offsets = [7, 0], sizes = [1, 48], strides = [1, 1]} : vector<28x48xf32> to vector<1x48xf32>
    %389 = vector.extract_strided_slice %160 {offsets = [21, 0], sizes = [1, 48], strides = [1, 1]} : vector<28x48xf32> to vector<1x48xf32>
    %390 = tpu.concatenate %388, %389 in 0 : vector<1x48xf32>, vector<1x48xf32> -> vector<2x48xf32>
    %cst_141 = arith.constant dense<0.000000e+00> : vector<2x48xf32>
    %391 = tpu.matmul %387, %161, %cst_141 {dimension_numbers = #tpu.dot_dimension_numbers<[1], [0], [0], [1], [0, 0, 1, 1], [], []>} : vector<2x16xf32>, vector<16x48xf32>, vector<2x48xf32> -> vector<2x48xf32>
    %392 = vector.broadcast %162 : vector<1x48xf32> to vector<2x48xf32>
    %393 = arith.addf %391, %392 : vector<2x48xf32>
    %394 = vector.extract_strided_slice %390 {offsets = [0, 0], sizes = [2, 16], strides = [1, 1]} : vector<2x48xf32> to vector<2x16xf32>
    %395 = vector.extract_strided_slice %393 {offsets = [0, 0], sizes = [2, 16], strides = [1, 1]} : vector<2x48xf32> to vector<2x16xf32>
    %396 = arith.addf %394, %395 : vector<2x16xf32>
    %397 = arith.negf %396 : vector<2x16xf32>
    %398 = math.exp %397 : vector<2x16xf32>
    %cst_142 = arith.constant 1.000000e+00 : f32
    %399 = vector.broadcast %cst_142 : f32 to vector<2x16xf32>
    %400 = arith.addf %399, %398 : vector<2x16xf32>
    %401 = arith.divf %399, %400 : vector<2x16xf32>
    %402 = vector.extract_strided_slice %390 {offsets = [0, 16], sizes = [2, 16], strides = [1, 1]} : vector<2x48xf32> to vector<2x16xf32>
    %403 = vector.extract_strided_slice %393 {offsets = [0, 16], sizes = [2, 16], strides = [1, 1]} : vector<2x48xf32> to vector<2x16xf32>
    %404 = arith.addf %402, %403 : vector<2x16xf32>
    %405 = arith.negf %404 : vector<2x16xf32>
    %406 = math.exp %405 : vector<2x16xf32>
    %cst_143 = arith.constant 1.000000e+00 : f32
    %407 = vector.broadcast %cst_143 : f32 to vector<2x16xf32>
    %408 = arith.addf %407, %406 : vector<2x16xf32>
    %409 = arith.divf %407, %408 : vector<2x16xf32>
    %410 = vector.extract_strided_slice %390 {offsets = [0, 32], sizes = [2, 16], strides = [1, 1]} : vector<2x48xf32> to vector<2x16xf32>
    %411 = vector.extract_strided_slice %393 {offsets = [0, 32], sizes = [2, 16], strides = [1, 1]} : vector<2x48xf32> to vector<2x16xf32>
    %412 = arith.mulf %401, %411 : vector<2x16xf32>
    %413 = arith.addf %410, %412 : vector<2x16xf32>
    %414 = math.tanh %413 : vector<2x16xf32>
    %cst_144 = arith.constant 1.000000e+00 : f32
    %415 = vector.broadcast %cst_144 : f32 to vector<2x16xf32>
    %416 = arith.subf %415, %409 : vector<2x16xf32>
    %417 = arith.mulf %416, %414 : vector<2x16xf32>
    %418 = arith.mulf %409, %387 : vector<2x16xf32>
    %419 = arith.addf %417, %418 : vector<2x16xf32>
    %420 = vector.extract_strided_slice %160 {offsets = [8, 0], sizes = [1, 48], strides = [1, 1]} : vector<28x48xf32> to vector<1x48xf32>
    %421 = vector.extract_strided_slice %160 {offsets = [22, 0], sizes = [1, 48], strides = [1, 1]} : vector<28x48xf32> to vector<1x48xf32>
    %422 = tpu.concatenate %420, %421 in 0 : vector<1x48xf32>, vector<1x48xf32> -> vector<2x48xf32>
    %cst_145 = arith.constant dense<0.000000e+00> : vector<2x48xf32>
    %423 = tpu.matmul %419, %161, %cst_145 {dimension_numbers = #tpu.dot_dimension_numbers<[1], [0], [0], [1], [0, 0, 1, 1], [], []>} : vector<2x16xf32>, vector<16x48xf32>, vector<2x48xf32> -> vector<2x48xf32>
    %424 = vector.broadcast %162 : vector<1x48xf32> to vector<2x48xf32>
    %425 = arith.addf %423, %424 : vector<2x48xf32>
    %426 = vector.extract_strided_slice %422 {offsets = [0, 0], sizes = [2, 16], strides = [1, 1]} : vector<2x48xf32> to vector<2x16xf32>
    %427 = vector.extract_strided_slice %425 {offsets = [0, 0], sizes = [2, 16], strides = [1, 1]} : vector<2x48xf32> to vector<2x16xf32>
    %428 = arith.addf %426, %427 : vector<2x16xf32>
    %429 = arith.negf %428 : vector<2x16xf32>
    %430 = math.exp %429 : vector<2x16xf32>
    %cst_146 = arith.constant 1.000000e+00 : f32
    %431 = vector.broadcast %cst_146 : f32 to vector<2x16xf32>
    %432 = arith.addf %431, %430 : vector<2x16xf32>
    %433 = arith.divf %431, %432 : vector<2x16xf32>
    %434 = vector.extract_strided_slice %422 {offsets = [0, 16], sizes = [2, 16], strides = [1, 1]} : vector<2x48xf32> to vector<2x16xf32>
    %435 = vector.extract_strided_slice %425 {offsets = [0, 16], sizes = [2, 16], strides = [1, 1]} : vector<2x48xf32> to vector<2x16xf32>
    %436 = arith.addf %434, %435 : vector<2x16xf32>
    %437 = arith.negf %436 : vector<2x16xf32>
    %438 = math.exp %437 : vector<2x16xf32>
    %cst_147 = arith.constant 1.000000e+00 : f32
    %439 = vector.broadcast %cst_147 : f32 to vector<2x16xf32>
    %440 = arith.addf %439, %438 : vector<2x16xf32>
    %441 = arith.divf %439, %440 : vector<2x16xf32>
    %442 = vector.extract_strided_slice %422 {offsets = [0, 32], sizes = [2, 16], strides = [1, 1]} : vector<2x48xf32> to vector<2x16xf32>
    %443 = vector.extract_strided_slice %425 {offsets = [0, 32], sizes = [2, 16], strides = [1, 1]} : vector<2x48xf32> to vector<2x16xf32>
    %444 = arith.mulf %433, %443 : vector<2x16xf32>
    %445 = arith.addf %442, %444 : vector<2x16xf32>
    %446 = math.tanh %445 : vector<2x16xf32>
    %cst_148 = arith.constant 1.000000e+00 : f32
    %447 = vector.broadcast %cst_148 : f32 to vector<2x16xf32>
    %448 = arith.subf %447, %441 : vector<2x16xf32>
    %449 = arith.mulf %448, %446 : vector<2x16xf32>
    %450 = arith.mulf %441, %419 : vector<2x16xf32>
    %451 = arith.addf %449, %450 : vector<2x16xf32>
    %452 = vector.extract_strided_slice %160 {offsets = [9, 0], sizes = [1, 48], strides = [1, 1]} : vector<28x48xf32> to vector<1x48xf32>
    %453 = vector.extract_strided_slice %160 {offsets = [23, 0], sizes = [1, 48], strides = [1, 1]} : vector<28x48xf32> to vector<1x48xf32>
    %454 = tpu.concatenate %452, %453 in 0 : vector<1x48xf32>, vector<1x48xf32> -> vector<2x48xf32>
    %cst_149 = arith.constant dense<0.000000e+00> : vector<2x48xf32>
    %455 = tpu.matmul %451, %161, %cst_149 {dimension_numbers = #tpu.dot_dimension_numbers<[1], [0], [0], [1], [0, 0, 1, 1], [], []>} : vector<2x16xf32>, vector<16x48xf32>, vector<2x48xf32> -> vector<2x48xf32>
    %456 = vector.broadcast %162 : vector<1x48xf32> to vector<2x48xf32>
    %457 = arith.addf %455, %456 : vector<2x48xf32>
    %458 = vector.extract_strided_slice %454 {offsets = [0, 0], sizes = [2, 16], strides = [1, 1]} : vector<2x48xf32> to vector<2x16xf32>
    %459 = vector.extract_strided_slice %457 {offsets = [0, 0], sizes = [2, 16], strides = [1, 1]} : vector<2x48xf32> to vector<2x16xf32>
    %460 = arith.addf %458, %459 : vector<2x16xf32>
    %461 = arith.negf %460 : vector<2x16xf32>
    %462 = math.exp %461 : vector<2x16xf32>
    %cst_150 = arith.constant 1.000000e+00 : f32
    %463 = vector.broadcast %cst_150 : f32 to vector<2x16xf32>
    %464 = arith.addf %463, %462 : vector<2x16xf32>
    %465 = arith.divf %463, %464 : vector<2x16xf32>
    %466 = vector.extract_strided_slice %454 {offsets = [0, 16], sizes = [2, 16], strides = [1, 1]} : vector<2x48xf32> to vector<2x16xf32>
    %467 = vector.extract_strided_slice %457 {offsets = [0, 16], sizes = [2, 16], strides = [1, 1]} : vector<2x48xf32> to vector<2x16xf32>
    %468 = arith.addf %466, %467 : vector<2x16xf32>
    %469 = arith.negf %468 : vector<2x16xf32>
    %470 = math.exp %469 : vector<2x16xf32>
    %cst_151 = arith.constant 1.000000e+00 : f32
    %471 = vector.broadcast %cst_151 : f32 to vector<2x16xf32>
    %472 = arith.addf %471, %470 : vector<2x16xf32>
    %473 = arith.divf %471, %472 : vector<2x16xf32>
    %474 = vector.extract_strided_slice %454 {offsets = [0, 32], sizes = [2, 16], strides = [1, 1]} : vector<2x48xf32> to vector<2x16xf32>
    %475 = vector.extract_strided_slice %457 {offsets = [0, 32], sizes = [2, 16], strides = [1, 1]} : vector<2x48xf32> to vector<2x16xf32>
    %476 = arith.mulf %465, %475 : vector<2x16xf32>
    %477 = arith.addf %474, %476 : vector<2x16xf32>
    %478 = math.tanh %477 : vector<2x16xf32>
    %cst_152 = arith.constant 1.000000e+00 : f32
    %479 = vector.broadcast %cst_152 : f32 to vector<2x16xf32>
    %480 = arith.subf %479, %473 : vector<2x16xf32>
    %481 = arith.mulf %480, %478 : vector<2x16xf32>
    %482 = arith.mulf %473, %451 : vector<2x16xf32>
    %483 = arith.addf %481, %482 : vector<2x16xf32>
    %c0_153 = arith.constant 0 : index
    %c0_154 = arith.constant 0 : index
    %484 = vector.load %arg12[%c0_153, %c0_154] : memref<2x16xf32, #tpu.memory_space<vmem>>, vector<2x16xf32>
    tpu.vector_store %arg12[%c0_153, %c0_154], %483 {strides = array<i32>} : memref<2x16xf32, #tpu.memory_space<vmem>>, vector<2x16xf32>,
    %c0_155 = arith.constant 0 : index
    %c0_156 = arith.constant 0 : index
    %485 = vector.load %arg10[%c0_155, %c0_156] : memref<16x128xf32, #tpu.memory_space<vmem>>, vector<16x128xf32>
    %cst_157 = arith.constant dense<0.000000e+00> : vector<2x128xf32>
    %486 = tpu.matmul %483, %485, %cst_157 {dimension_numbers = #tpu.dot_dimension_numbers<[1], [0], [0], [1], [0, 0, 1, 1], [], []>} : vector<2x16xf32>, vector<16x128xf32>, vector<2x128xf32> -> vector<2x128xf32>
    %c0_158 = arith.constant 0 : index
    %c0_159 = arith.constant 0 : index
    %487 = vector.load %arg11[%c0_158, %c0_159] : memref<1x128xf32, #tpu.memory_space<vmem>>, vector<1x128xf32>
    %488 = vector.broadcast %487 : vector<1x128xf32> to vector<2x128xf32>
    %489 = arith.addf %486, %488 : vector<2x128xf32>
    %490 = vector.extract_strided_slice %489 {offsets = [0, 0], sizes = [2, 32], strides = [1, 1]} : vector<2x128xf32> to vector<2x32xf32>
    %491 = vector.extract_strided_slice %489 {offsets = [0, 32], sizes = [2, 32], strides = [1, 1]} : vector<2x128xf32> to vector<2x32xf32>
    %492 = vector.extract_strided_slice %489 {offsets = [0, 64], sizes = [2, 32], strides = [1, 1]} : vector<2x128xf32> to vector<2x32xf32>
    %493 = vector.extract_strided_slice %489 {offsets = [0, 96], sizes = [2, 32], strides = [1, 1]} : vector<2x128xf32> to vector<2x32xf32>
    %494 = vector.shape_cast %490 : vector<2x32xf32> to vector<1x2x32xf32>
    %495 = vector.shape_cast %491 : vector<2x32xf32> to vector<1x2x32xf32>
    %496 = vector.shape_cast %492 : vector<2x32xf32> to vector<1x2x32xf32>
    %497 = vector.shape_cast %493 : vector<2x32xf32> to vector<1x2x32xf32>
    %498 = tpu.concatenate %494, %495, %496, %497 in 0 : vector<1x2x32xf32>, vector<1x2x32xf32>, vector<1x2x32xf32>, vector<1x2x32xf32> -> vector<4x2x32xf32>
    %499 = vector.extract_strided_slice %155 {offsets = [10, 0], sizes = [1, 32], strides = [1, 1]} : vector<28x32xf32> to vector<1x32xf32>
    %500 = vector.extract_strided_slice %155 {offsets = [24, 0], sizes = [1, 32], strides = [1, 1]} : vector<28x32xf32> to vector<1x32xf32>
    %501 = tpu.concatenate %499, %500 in 0 : vector<1x32xf32>, vector<1x32xf32> -> vector<2x32xf32>
    %502 = vector.extract_strided_slice %155 {offsets = [11, 0], sizes = [1, 32], strides = [1, 1]} : vector<28x32xf32> to vector<1x32xf32>
    %503 = vector.extract_strided_slice %155 {offsets = [25, 0], sizes = [1, 32], strides = [1, 1]} : vector<28x32xf32> to vector<1x32xf32>
    %504 = tpu.concatenate %502, %503 in 0 : vector<1x32xf32>, vector<1x32xf32> -> vector<2x32xf32>
    %505 = vector.extract_strided_slice %155 {offsets = [12, 0], sizes = [1, 32], strides = [1, 1]} : vector<28x32xf32> to vector<1x32xf32>
    %506 = vector.extract_strided_slice %155 {offsets = [26, 0], sizes = [1, 32], strides = [1, 1]} : vector<28x32xf32> to vector<1x32xf32>
    %507 = tpu.concatenate %505, %506 in 0 : vector<1x32xf32>, vector<1x32xf32> -> vector<2x32xf32>
    %508 = vector.extract_strided_slice %155 {offsets = [13, 0], sizes = [1, 32], strides = [1, 1]} : vector<28x32xf32> to vector<1x32xf32>
    %509 = vector.extract_strided_slice %155 {offsets = [27, 0], sizes = [1, 32], strides = [1, 1]} : vector<28x32xf32> to vector<1x32xf32>
    %510 = tpu.concatenate %508, %509 in 0 : vector<1x32xf32>, vector<1x32xf32> -> vector<2x32xf32>
    %511 = vector.shape_cast %501 : vector<2x32xf32> to vector<1x2x32xf32>
    %512 = vector.shape_cast %504 : vector<2x32xf32> to vector<1x2x32xf32>
    %513 = vector.shape_cast %507 : vector<2x32xf32> to vector<1x2x32xf32>
    %514 = vector.shape_cast %510 : vector<2x32xf32> to vector<1x2x32xf32>
    %515 = tpu.concatenate %511, %512, %513, %514 in 0 : vector<1x2x32xf32>, vector<1x2x32xf32>, vector<1x2x32xf32>, vector<1x2x32xf32> -> vector<4x2x32xf32>
    %cst_160 = arith.constant dense<0.000000e+00> : vector<4x2x2xf32>
    %516 = tpu.matmul %498, %515, %cst_160 {dimension_numbers = #tpu.dot_dimension_numbers<[2], [2], [1], [1], [0, 0, 0, 1, 1, 1], [0], [0]>} : vector<4x2x32xf32>, vector<4x2x32xf32>, vector<4x2x2xf32> -> vector<4x2x2xf32>
    %cst_161 = arith.constant dense<0xFF800000> : vector<4x2xf32>
    %517 = vector.multi_reduction <maximumf>, %516, %cst_161 [2] : vector<4x2x2xf32> to vector<4x2xf32>
    %518 = vector.shape_cast %517 : vector<4x2xf32> to vector<4x2x1xf32>
    %519 = vector.broadcast %518 : vector<4x2x1xf32> to vector<4x2x2xf32>
    %520 = arith.subf %516, %519 : vector<4x2x2xf32>
    %521 = math.exp %520 : vector<4x2x2xf32>
    %cst_162 = arith.constant dense<0.000000e+00> : vector<4x2xf32>
    %522 = vector.multi_reduction <add>, %521, %cst_162 [2] : vector<4x2x2xf32> to vector<4x2xf32>
    %523 = vector.shape_cast %522 : vector<4x2xf32> to vector<4x2x1xf32>
    %524 = math.log %523 : vector<4x2x1xf32>
    %525 = arith.addf %518, %524 : vector<4x2x1xf32>
    %526 = tpu.iota {dimensions = array<i32: 1>} : vector<4x2x2xi32>
    %527 = tpu.iota {dimensions = array<i32: 2>} : vector<4x2x2xi32>
    %528 = arith.cmpi eq, %526, %527 : vector<4x2x2xi32>
    %cst_163 = arith.constant 0.000000e+00 : f32
    %529 = vector.broadcast %cst_163 : f32 to vector<4x2x2xf32>
    %530 = arith.select %528, %516, %529 : vector<4x2x2xi1>, vector<4x2x2xf32>
    %cst_164 = arith.constant dense<0.000000e+00> : vector<4x2xf32>
    %531 = vector.multi_reduction <add>, %530, %cst_164 [2] : vector<4x2x2xf32> to vector<4x2xf32>
    %532 = vector.shape_cast %531 : vector<4x2xf32> to vector<4x2x1xf32>
    %533 = arith.subf %532, %525 : vector<4x2x1xf32>
    %534 = vector.broadcast %518 : vector<4x2x1xf32> to vector<4x2x2xf32>
    %535 = arith.cmpf oeq, %516, %534 : vector<4x2x2xf32>
    %c2_i32 = arith.constant 2 : i32
    %536 = vector.broadcast %c2_i32 : i32 to vector<4x2x2xi32>
    %537 = arith.select %535, %527, %536 : vector<4x2x2xi1>, vector<4x2x2xi32>
    %cst_165 = arith.constant dense<2147483647> : vector<4x2xi32>
    %538 = vector.multi_reduction <minsi>, %537, %cst_165 [2] : vector<4x2x2xi32> to vector<4x2xi32>
    %539 = vector.shape_cast %538 : vector<4x2xi32> to vector<4x2x1xi32>
    %540 = tpu.iota {dimensions = array<i32: 1>} : vector<4x2x1xi32>
    %541 = arith.cmpi eq, %539, %540 : vector<4x2x1xi32>
    %542 = arith.extui %541 : vector<4x2x1xi1> to vector<4x2x1xi32>
    %543 = arith.sitofp %542 : vector<4x2x1xi32> to vector<4x2x1xf32>
    %cst_166 = arith.constant dense<0.000000e+00> : vector<2x1xf32>
    %544 = vector.multi_reduction <add>, %533, %cst_166 [0] : vector<4x2x1xf32> to vector<2x1xf32>
    %cst_167 = arith.constant dense<0.000000e+00> : vector<1xf32>
    %545 = vector.multi_reduction <add>, %544, %cst_167 [0] : vector<2x1xf32> to vector<1xf32>
    %546 = vector.shape_cast %545 : vector<1xf32> to vector<1x1xf32>
    %cst_168 = arith.constant -1.250000e-01 : f32
    %547 = vector.broadcast %cst_168 : f32 to vector<1x1xf32>
    %548 = arith.mulf %546, %547 : vector<1x1xf32>
    %c0_169 = arith.constant 0 : index
    %c0_170 = arith.constant 0 : index
    %549 = vector.load %arg13[%c0_169, %c0_170] : memref<1x1xf32, #tpu.memory_space<vmem>>, vector<1x1xf32>
    tpu.vector_store %arg13[%c0_169, %c0_170], %548 {strides = array<i32>} : memref<1x1xf32, #tpu.memory_space<vmem>>, vector<1x1xf32>,
    %cst_171 = arith.constant dense<0.000000e+00> : vector<2x1xf32>
    %550 = vector.multi_reduction <add>, %543, %cst_171 [0] : vector<4x2x1xf32> to vector<2x1xf32>
    %cst_172 = arith.constant dense<0.000000e+00> : vector<1xf32>
    %551 = vector.multi_reduction <add>, %550, %cst_172 [0] : vector<2x1xf32> to vector<1xf32>
    %552 = vector.shape_cast %551 : vector<1xf32> to vector<1x1xf32>
    %cst_173 = arith.constant 1.250000e-01 : f32
    %553 = vector.broadcast %cst_173 : f32 to vector<1x1xf32>
    %554 = arith.mulf %552, %553 : vector<1x1xf32>
    %c0_174 = arith.constant 0 : index
    %c0_175 = arith.constant 0 : index
    %555 = vector.load %arg14[%c0_174, %c0_175] : memref<1x1xf32, #tpu.memory_space<vmem>>, vector<1x1xf32>
    tpu.vector_store %arg14[%c0_174, %c0_175], %554 {strides = array<i32>} : memref<1x1xf32, #tpu.memory_space<vmem>>, vector<1x1xf32>,
    return
  }
}

</mosaic_0001>

<llo_original>
// kernel: cpc_forward.1
$region0: #{cpc_forward.1}
  #allocation0 [shape = 'u32[]', space=smem, size = 0x4, offset = 0x4, fixed_abs, tag = 'smem constant byte address 0x4 - core index']
  #allocation1 [shape = 'u32[72,128]{1,0:T(1,128)}', space=vmem, size = 0x9000, scoped, tag = 'internal scratch']
  #allocation2 [shape = 'f32[62,32]{1,0:T(8,128)}', space=vmem, size = 0x8000, scoped, tag = 'scratch operand']
  #allocation3 [shape = 'f32[32,32]{1,0:T(8,128)}', space=vmem, size = 0x4000, scoped, tag = 'scratch operand']
  #allocation4 [shape = 'f32[34,32]{1,0:T(8,128)}', space=vmem, size = 0x5000, scoped, tag = 'scratch operand']
  %s0 = inlined_call_operand.vmem [shape: f32[56,8], index: 0, kind: input, shape index: {}]
  %s1 = inlined_call_operand.vmem [shape: f32[8,32], index: 1, kind: input, shape index: {}]
  %s2 = inlined_call_operand.vmem [shape: f32[128,32], index: 2, kind: input, shape index: {}]
  %s3 = inlined_call_operand.vmem [shape: f32[96,32], index: 3, kind: input, shape index: {}]
  %s4 = inlined_call_operand.vmem [shape: f32[128,32], index: 4, kind: input, shape index: {}]
  %s5 = inlined_call_operand.vmem [shape: f32[32,48], index: 5, kind: input, shape index: {}]
  %s6 = inlined_call_operand.vmem [shape: f32[16,48], index: 6, kind: input, shape index: {}]
  %s7 = inlined_call_operand.vmem [shape: f32[1,48], index: 7, kind: input, shape index: {}]
  %s8 = inlined_call_operand.vmem [shape: f32[1,48], index: 8, kind: input, shape index: {}]
  %s9 = inlined_call_operand.vmem [shape: f32[2,16], index: 9, kind: input, shape index: {}]
  %s10 = inlined_call_operand.vmem [shape: f32[16,128], index: 10, kind: input, shape index: {}]
  %s11 = inlined_call_operand.vmem [shape: f32[1,128], index: 11, kind: input, shape index: {}]
  %s12 = inlined_call_operand.vmem [shape: f32[2,16], index: 12, kind: output, shape index: {0}]
  %s13 = inlined_call_operand.hbm [shape: f32[1,1], index: 13, kind: output, shape index: {1}]
  %s14 = inlined_call_operand.hbm [shape: f32[1,1], index: 14, kind: output, shape index: {2}]
  %15 = xla_tuple %s12, %s13, %s14
  %s16 = sld [smem:[#allocation0]]
  $region74: #{cpc_forward.1} parent=0
    _
  %s18 = ssub.s32 1, %s16
  %s19 = scalar_select 0, %s18, %s16
  $region1: #{cpc_forward.1} parent=0
    #allocation5 [shape = 'u8[512]{0}', space=vmem, size = 0x400, scoped, tag = 'output window, operand 1, single buffered']
    #allocation6 [shape = 's32[1]{0}', space=sflag, size = 0x4, scoped, tag = 'scoped memory for cpc_forward.1']
    #allocation7 [shape = 'u8[512]{0}', space=vmem, size = 0x400, scoped, tag = 'output window, operand 2, single buffered']
    #allocation8 [shape = 's32[1]{0}', space=sflag, size = 0x4, scoped, tag = 'scoped memory for cpc_forward.1']
    %20 = vsyncpa [#allocation6], 0
    %21 = vsyncpa [#allocation8], 0
    // Predicated region
    $region2: #{cpc_forward.1} parent=1 // pred_check
      _
    $region3: #{cpc_forward.1} parent=1 // pred_check_branch
      %23 = sbr.rel (0) target = $region5
    $region4: #{cpc_forward.1} parent=1 // pred_region
      _
    $region5: #{cpc_forward.1} parent=1 // pred_fallthru
      _
    // Predicated region
    $region6: #{cpc_forward.1} parent=1 // pred_check
      _
    $region7: #{cpc_forward.1} parent=1 // pred_check_branch
      %25 = sbr.rel (0) target = $region9
    $region8: #{cpc_forward.1} parent=1 // pred_region
      _
    $region9: #{cpc_forward.1} parent=1 // pred_fallthru
      _
    // Predicated region
    $region10: #{cpc_forward.1} parent=1 // pred_check
      _
    $region11: #{cpc_forward.1} parent=1 // pred_check_branch
      %27 = sbr.rel (0) target = $region13
    $region12: #{cpc_forward.1} parent=1 // pred_region
      _
    $region13: #{cpc_forward.1} parent=1 // pred_fallthru
      _
    // Predicated region
    $region14: #{cpc_forward.1} parent=1 // pred_check
      _
    $region15: #{cpc_forward.1} parent=1 // pred_check_branch
      %29 = sbr.rel (0) target = $region17
    $region16: #{cpc_forward.1} parent=1 // pred_region
      _
    $region17: #{cpc_forward.1} parent=1 // pred_fallthru
      _
    // Predicated region
    $region18: #{cpc_forward.1} parent=1 // pred_check
      _
    $region19: #{cpc_forward.1} parent=1 // pred_check_branch
      %31 = sbr.rel (0) target = $region21
    $region20: #{cpc_forward.1} parent=1 // pred_region
      _
    $region21: #{cpc_forward.1} parent=1 // pred_fallthru
      _
    // Predicated region
    $region22: #{cpc_forward.1} parent=1 // pred_check
      _
    $region23: #{cpc_forward.1} parent=1 // pred_check_branch
      %33 = sbr.rel (0) target = $region25
    $region24: #{cpc_forward.1} parent=1 // pred_region
      _
    $region25: #{cpc_forward.1} parent=1 // pred_fallthru
      _
    // Predicated region
    $region26: #{cpc_forward.1} parent=1 // pred_check
      _
    $region27: #{cpc_forward.1} parent=1 // pred_check_branch
      %35 = sbr.rel (0) target = $region29
    $region28: #{cpc_forward.1} parent=1 // pred_region
      _
    $region29: #{cpc_forward.1} parent=1 // pred_fallthru
      _
    // Predicated region
    $region30: #{cpc_forward.1} parent=1 // pred_check
      _
    $region31: #{cpc_forward.1} parent=1 // pred_check_branch
      %37 = sbr.rel (0) target = $region33
    $region32: #{cpc_forward.1} parent=1 // pred_region
      _
    $region33: #{cpc_forward.1} parent=1 // pred_fallthru
      _
    // Predicated region
    $region34: #{cpc_forward.1} parent=1 // pred_check
      _
    $region35: #{cpc_forward.1} parent=1 // pred_check_branch
      %39 = sbr.rel (0) target = $region37
    $region36: #{cpc_forward.1} parent=1 // pred_region
      _
    $region37: #{cpc_forward.1} parent=1 // pred_fallthru
      _
    // Predicated region
    $region38: #{cpc_forward.1} parent=1 // pred_check
      _
    $region39: #{cpc_forward.1} parent=1 // pred_check_branch
      %41 = sbr.rel (0) target = $region41
    $region40: #{cpc_forward.1} parent=1 // pred_region
      _
    $region41: #{cpc_forward.1} parent=1 // pred_fallthru
      _
    // Predicated region
    $region42: #{cpc_forward.1} parent=1 // pred_check
      _
    $region43: #{cpc_forward.1} parent=1 // pred_check_branch
      %43 = sbr.rel (0) target = $region45
    $region44: #{cpc_forward.1} parent=1 // pred_region
      _
    $region45: #{cpc_forward.1} parent=1 // pred_fallthru
      _
    // Predicated region
    $region46: #{cpc_forward.1} parent=1 // pred_check
      _
    $region47: #{cpc_forward.1} parent=1 // pred_check_branch
      %45 = sbr.rel (0) target = $region49
    $region48: #{cpc_forward.1} parent=1 // pred_region
      _
    $region49: #{cpc_forward.1} parent=1 // pred_fallthru
      _
    %v46 = vld [vmem:[%s0] sm:$0xff]
    %v47 = vld [vmem:[%s0 + $0x8] sm:$0xff]
    %v48 = vld [vmem:[%s0 + $0x10] sm:$0xff]
    %v49 = vld [vmem:[%s0 + $0x18] sm:$0xff]
    %v50 = vld [vmem:[%s0 + $0x20] sm:$0xff]
    %v51 = vld [vmem:[%s0 + $0x28] sm:$0xff]
    %v52 = vld [vmem:[%s0 + $0x30] sm:$0xff]
    %v53 = vld [vmem:[%s1] sm:$0xff]
    %vm54 = vcmask 64512
    %v56 = vsel %vm54, %v46, 0
    %v59 = vsel %vm54, %v47, 0
    %v62 = vsel %vm54, %v48, 0
    %v65 = vsel %vm54, %v49, 0
    %v68 = vsel %vm54, %v50, 0
    %v71 = vsel %vm54, %v51, 0
    %v74 = vsel %vm54, %v52, 0
    %76 = vmatpush.msra.mxu0 0.0
    %77 = vmatpush.msra.mxu0 0.0
    %78 = vmatpush.msra.mxu0 0.0
    %79 = vmatpush.msra.mxu0 0.0
    %80 = vmatpush.msra.mxu0 0.0
    %81 = vmatpush.msra.mxu0 0.0
    %82 = vmatpush.msra.mxu0 0.0
    %83 = vmatpush.msra.mxu0 0.0
    %84 = vmatpush.msra.mxu0 0.0
    %85 = vmatpush.msra.mxu0 0.0
    %86 = vmatpush.msra.mxu0 0.0
    %87 = vmatpush.msra.mxu0 0.0
    %88 = vmatpush.msra.mxu0 0.0
    %89 = vmatpush.msra.mxu0 0.0
    %90 = vmatpush.msra.mxu0 0.0
    %91 = vmatpush.msra.mxu0 %v53
    %92 = vmatmul.f32.gmra.mxu0 %v56
    %v93 = vpop.f32.mrf.mxu0
    %v94 = vadd.f32 0.0, %v93
    %95 = vmatmul.f32.gmra.mxu0 %v59
    %v96 = vpop.f32.mrf.mxu0
    %v97 = vadd.f32 0.0, %v96
    %98 = vmatmul.f32.gmra.mxu0 %v62
    %v99 = vpop.f32.mrf.mxu0
    %v100 = vadd.f32 0.0, %v99
    %101 = vmatmul.f32.gmra.mxu0 %v65
    %v102 = vpop.f32.mrf.mxu0
    %v103 = vadd.f32 0.0, %v102
    %104 = vmatmul.f32.gmra.mxu0 %v68
    %v105 = vpop.f32.mrf.mxu0
    %v106 = vadd.f32 0.0, %v105
    %107 = vmatmul.f32.gmra.mxu0 %v71
    %v108 = vpop.f32.mrf.mxu0
    %v109 = vadd.f32 0.0, %v108
    %110 = vmatmul.f32.gmra.mxu0 %v74
    %v111 = vpop.f32.mrf.mxu0
    %v112 = vadd.f32 0.0, %v111
    %113 = vdwg.mxu0
    %vm114 = vcmask 261120
    %v115 = vsel %vm114, %v94, 0.0
    %v116 = vsel %vm114, %v97, 0.0
    %v117 = vadd.f32 %v115, %v116
    %v118 = vsel %vm114, %v100, 0.0
    %v119 = vadd.f32 %v117, %v118
    %v120 = vsel %vm114, %v103, 0.0
    %v121 = vadd.f32 %v119, %v120
    %v122 = vsel %vm114, %v106, 0.0
    %v123 = vadd.f32 %v121, %v122
    %v124 = vsel %vm114, %v109, 0.0
    %v125 = vadd.f32 %v123, %v124
    %v126 = vsel %vm114, %v112, 0.0
    %v127 = vadd.f32 %v125, %v126
    %v128 = vrot.slane %v127, 4
    %v129 = vadd.f32 %v127, %v128
    %v130 = vrot.slane %v129, 2
    %v131 = vadd.f32 %v129, %v130
    %v132 = vrot.slane %v131, 1
    %v133 = vadd.f32 %v131, %v132
    %v134 = vrcp.pop 56.0
    %v135 = vmul.f32 56.0, %v134
    %v136 = vsub.f32 1.0, %v135
    %v137 = vmul.f32 %v134, %v136
    %v138 = vadd.f32 %v134, %v137
    %vm139 = vweird.f32 %v134
    %v140 = vsel %vm139, %v134, %v138
    %v141 = vmul.f32 %v133, %v140
    %v142 = vsub.f32 %v94, %v141
    %v143 = vsub.f32 %v97, %v141
    %v144 = vsub.f32 %v100, %v141
    %v145 = vsub.f32 %v103, %v141
    %v146 = vsub.f32 %v106, %v141
    %v147 = vsub.f32 %v109, %v141
    %v148 = vsub.f32 %v112, %v141
    %v149 = vmul.f32 %v142, %v142
    %v150 = vmul.f32 %v143, %v143
    %v151 = vmul.f32 %v144, %v144
    %v152 = vmul.f32 %v145, %v145
    %v153 = vmul.f32 %v146, %v146
    %v154 = vmul.f32 %v147, %v147
    %v155 = vmul.f32 %v148, %v148
    %v156 = vsel %vm114, %v149, 0.0
    %v157 = vsel %vm114, %v150, 0.0
    %v158 = vadd.f32 %v156, %v157
    %v159 = vsel %vm114, %v151, 0.0
    %v160 = vadd.f32 %v158, %v159
    %v161 = vsel %vm114, %v152, 0.0
    %v162 = vadd.f32 %v160, %v161
    %v163 = vsel %vm114, %v153, 0.0
    %v164 = vadd.f32 %v162, %v163
    %v165 = vsel %vm114, %v154, 0.0
    %v166 = vadd.f32 %v164, %v165
    %v167 = vsel %vm114, %v155, 0.0
    %v168 = vadd.f32 %v166, %v167
    %v169 = vrot.slane %v168, 4
    %v170 = vadd.f32 %v168, %v169
    %v171 = vrot.slane %v170, 2
    %v172 = vadd.f32 %v170, %v171
    %v173 = vrot.slane %v172, 1
    %v174 = vadd.f32 %v172, %v173
    %v175 = vmul.f32 %v174, %v140
    %v176 = vadd.f32 %v175, 1e-05
    %v177 = vrsqrt.pop %v176
    %v178 = vmul.f32 %v177, %v176
    %v179 = vmul.f32 %v178, %v177
    %v180 = vmul.f32 0.5, %v179
    %v181 = vsub.f32 1.5, %v180
    %v182 = vmul.f32 %v177, %v181
    %vm183 = vweird.f32 %v176
    %vm184 = vweird.f32 %v177
    %vm185 = vmor %vm183, %vm184
    %v186 = vsel %vm185, %v177, %v182
    %v187 = vmul.f32 %v142, %v186
    %v188 = vmul.f32 %v143, %v186
    %v189 = vmul.f32 %v144, %v186
    %v190 = vmul.f32 %v145, %v186
    %v191 = vmul.f32 %v146, %v186
    %v192 = vmul.f32 %v147, %v186
    %v193 = vmul.f32 %v148, %v186
    %vm194 = vcmp.ge.f32.partialorder %v187, 0.0
    %vm195 = vcmp.ge.f32.partialorder %v188, 0.0
    %vm196 = vcmp.ge.f32.partialorder %v189, 0.0
    %vm197 = vcmp.ge.f32.partialorder %v190, 0.0
    %vm198 = vcmp.ge.f32.partialorder %v191, 0.0
    %vm199 = vcmp.ge.f32.partialorder %v192, 0.0
    %vm200 = vcmp.ge.f32.partialorder %v193, 0.0
    %v201 = vmul.f32 %v187, 0.01
    %v202 = vmul.f32 %v188, 0.01
    %v203 = vmul.f32 %v189, 0.01
    %v204 = vmul.f32 %v190, 0.01
    %v205 = vmul.f32 %v191, 0.01
    %v206 = vmul.f32 %v192, 0.01
    %v207 = vmul.f32 %v193, 0.01
    %v208 = vsel %vm194, %v187, %v201
    %v209 = vsel %vm195, %v188, %v202
    %v210 = vsel %vm196, %v189, %v203
    %v211 = vsel %vm197, %v190, %v204
    %v212 = vsel %vm198, %v191, %v205
    %v213 = vsel %vm199, %v192, %v206
    %v214 = vsel %vm200, %v193, %v207
    %vm215 = vcmask 256000
    %216 = vst.msk [vmem:[#allocation2] sm:$0x7] %vm215, 0.0
    %217 = vst.msk [vmem:[#allocation2 + $0x3] sm:$0xff] %vm114, %v208
    %218 = vst.msk [vmem:[#allocation2 + $0xb] sm:$0xff] %vm114, %v209
    %219 = vst.msk [vmem:[#allocation2 + $0x13] sm:$0xff] %vm114, %v210
    %vm220 = vcmask 257024
    %221 = vst.msk [vmem:[#allocation2 + $0x1b] sm:$0xf] %vm220, %v211
    %222 = vst.msk [vmem:[#allocation2 + $0x1f] sm:$0x7] %vm215, 0.0
    %vm223 = vcmask 261124
    %224 = vst.msk [vmem:[#allocation2 + $0x1e] sm:$0xf0] %vm223, %v211
    %225 = vst.msk [vmem:[#allocation2 + $0x26] sm:$0xff] %vm114, %v212
    %226 = vst.msk [vmem:[#allocation2 + $0x2e] sm:$0xff] %vm114, %v213
    %227 = vst.msk [vmem:[#allocation2 + $0x36] sm:$0xff] %vm114, %v214
    %v228 = vld [vmem:[#allocation2] ss:$2 sm:$0xff]
    %s229 = scalar_lea.vmem [#allocation2], 16
    %v230 = vld [vmem:[%s229] ss:$2 sm:$0x3f]
    %s231 = scalar_lea.vmem [#allocation2], 1
    %v232 = vld [vmem:[%s231] ss:$2 sm:$0xff]
    %s233 = scalar_lea.vmem [#allocation2], 17
    %v234 = vld [vmem:[%s233] ss:$2 sm:$0x3f]
    %s235 = scalar_lea.vmem [#allocation2], 2
    %v236 = vld [vmem:[%s235] ss:$2 sm:$0xff]
    %s237 = scalar_lea.vmem [#allocation2], 18
    %v238 = vld [vmem:[%s237] ss:$2 sm:$0x3f]
    %s239 = scalar_lea.vmem [#allocation2], 3
    %v240 = vld [vmem:[%s239] ss:$2 sm:$0xff]
    %s241 = scalar_lea.vmem [#allocation2], 19
    %v242 = vld [vmem:[%s241] ss:$2 sm:$0x3f]
    %245 = vrot.lane.b32.xlu0 %v232, 32
    %v246 = vpop.permute.xlu0 %245
    %247 = vrot.lane.b32.xlu0 %v234, 32
    %v248 = vpop.permute.xlu0 %247
    %253 = vrot.lane.b32.xlu0 %v236, 64
    %v254 = vpop.permute.xlu0 %253
    %255 = vrot.lane.b32.xlu0 %v238, 64
    %v256 = vpop.permute.xlu0 %255
    %261 = vrot.lane.b32.xlu0 %v240, 96
    %v262 = vpop.permute.xlu0 %261
    %263 = vrot.lane.b32.xlu0 %v242, 96
    %v264 = vpop.permute.xlu0 %263
    %v267 = vsel %vm114, %v228, %v246
    %v268 = vsel %vm114, %v230, %v248
    %vm269 = vcmask 523264
    %v270 = vsel %vm269, %v267, %v254
    %v271 = vsel %vm269, %v268, %v256
    %vm272 = vcmask 785408
    %v273 = vsel %vm272, %v270, %v262
    %v274 = vsel %vm272, %v271, %v264
    %s275 = scalar_lea.vmem [#allocation2], 31
    %v276 = vld [vmem:[%s275] ss:$2 sm:$0xff]
    %s277 = scalar_lea.vmem [#allocation2], 47
    %v278 = vld [vmem:[%s277] ss:$2 sm:$0x3f]
    %s279 = scalar_lea.vmem [#allocation2], 32
    %v280 = vld [vmem:[%s279] ss:$2 sm:$0xff]
    %s281 = scalar_lea.vmem [#allocation2], 48
    %v282 = vld [vmem:[%s281] ss:$2 sm:$0x3f]
    %s283 = scalar_lea.vmem [#allocation2], 33
    %v284 = vld [vmem:[%s283] ss:$2 sm:$0xff]
    %s285 = scalar_lea.vmem [#allocation2], 49
    %v286 = vld [vmem:[%s285] ss:$2 sm:$0x3f]
    %s287 = scalar_lea.vmem [#allocation2], 34
    %v288 = vld [vmem:[%s287] ss:$2 sm:$0xff]
    %s289 = scalar_lea.vmem [#allocation2], 50
    %v290 = vld [vmem:[%s289] ss:$2 sm:$0x3f]
    %293 = vrot.lane.b32.xlu0 %v280, 32
    %v294 = vpop.permute.xlu0 %293
    %295 = vrot.lane.b32.xlu0 %v282, 32
    %v296 = vpop.permute.xlu0 %295
    %301 = vrot.lane.b32.xlu0 %v284, 64
    %v302 = vpop.permute.xlu0 %301
    %303 = vrot.lane.b32.xlu0 %v286, 64
    %v304 = vpop.permute.xlu0 %303
    %309 = vrot.lane.b32.xlu0 %v288, 96
    %v310 = vpop.permute.xlu0 %309
    %311 = vrot.lane.b32.xlu0 %v290, 96
    %v312 = vpop.permute.xlu0 %311
    %v315 = vsel %vm114, %v276, %v294
    %v316 = vsel %vm114, %v278, %v296
    %v317 = vsel %vm269, %v315, %v302
    %v318 = vsel %vm269, %v316, %v304
    %v319 = vsel %vm272, %v317, %v310
    %v320 = vsel %vm272, %v318, %v312
    %vm323 = vcmask 1045504
    %v324 = vrot.slane %v319, 2
    %v325 = vrot.slane %v320, 2
    %v326 = vsel %vm323, %v324, %v325
    %v330 = vsel %vm323, %v274, %v324
    %v331 = vld [vmem:[%s2] sm:$0xff]
    %v332 = vld [vmem:[%s2 + $0x8] sm:$0xff]
    %v333 = vld [vmem:[%s2 + $0x10] sm:$0xff]
    %v334 = vld [vmem:[%s2 + $0x18] sm:$0xff]
    %v335 = vld [vmem:[%s2 + $0x20] sm:$0xff]
    %v336 = vld [vmem:[%s2 + $0x28] sm:$0xff]
    %v337 = vld [vmem:[%s2 + $0x30] sm:$0xff]
    %v338 = vld [vmem:[%s2 + $0x38] sm:$0xff]
    %v339 = vld [vmem:[%s2 + $0x40] sm:$0xff]
    %v340 = vld [vmem:[%s2 + $0x48] sm:$0xff]
    %v341 = vld [vmem:[%s2 + $0x50] sm:$0xff]
    %v342 = vld [vmem:[%s2 + $0x58] sm:$0xff]
    %v343 = vld [vmem:[%s2 + $0x60] sm:$0xff]
    %v344 = vld [vmem:[%s2 + $0x68] sm:$0xff]
    %v345 = vld [vmem:[%s2 + $0x70] sm:$0xff]
    %v346 = vld [vmem:[%s2 + $0x78] sm:$0xff]
    %347 = vmatpush.msra.mxu0 %v346
    %348 = vmatpush.msra.mxu0 %v345
    %349 = vmatpush.msra.mxu0 %v344
    %350 = vmatpush.msra.mxu0 %v343
    %351 = vmatpush.msra.mxu0 %v342
    %352 = vmatpush.msra.mxu0 %v341
    %353 = vmatpush.msra.mxu0 %v340
    %354 = vmatpush.msra.mxu0 %v339
    %355 = vmatpush.msra.mxu0 %v338
    %356 = vmatpush.msra.mxu0 %v337
    %357 = vmatpush.msra.mxu0 %v336
    %358 = vmatpush.msra.mxu0 %v335
    %359 = vmatpush.msra.mxu0 %v334
    %360 = vmatpush.msra.mxu0 %v333
    %361 = vmatpush.msra.mxu0 %v332
    %362 = vmatpush.msra.mxu0 %v331
    %363 = vmatmul.f32.gmra.mxu0 %v273
    %v364 = vpop.f32.mrf.mxu0
    %v365 = vadd.f32 0.0, %v364
    %366 = vmatmul.f32.gmra.mxu0 %v330
    %v367 = vpop.f32.mrf.mxu0
    %v368 = vadd.f32 0.0, %v367
    %369 = vmatmul.f32.gmra.mxu0 %v326
    %v370 = vpop.f32.mrf.mxu0
    %v371 = vadd.f32 0.0, %v370
    %372 = vmatmul.f32.gmra.mxu0 %v325
    %v373 = vpop.f32.mrf.mxu0
    %v374 = vadd.f32 0.0, %v373
    %375 = vdwg.mxu0
    %v376 = vsel %vm114, %v365, 0.0
    %v377 = vsel %vm114, %v368, 0.0
    %v378 = vadd.f32 %v376, %v377
    %v379 = vsel %vm114, %v371, 0.0
    %v380 = vadd.f32 %v378, %v379
    %v381 = vsel %vm220, %v374, 0.0
    %v382 = vadd.f32 %v380, %v381
    %v383 = vrot.slane %v382, 4
    %v384 = vadd.f32 %v382, %v383
    %v385 = vrot.slane %v384, 2
    %v386 = vadd.f32 %v384, %v385
    %v387 = vrot.slane %v386, 1
    %v388 = vadd.f32 %v386, %v387
    %v389 = vrcp.pop 28.0
    %v390 = vmul.f32 28.0, %v389
    %v391 = vsub.f32 1.0, %v390
    %v392 = vmul.f32 %v389, %v391
    %v393 = vadd.f32 %v389, %v392
    %vm394 = vweird.f32 %v389
    %v395 = vsel %vm394, %v389, %v393
    %v396 = vmul.f32 %v388, %v395
    %v397 = vsub.f32 %v365, %v396
    %v398 = vsub.f32 %v368, %v396
    %v399 = vsub.f32 %v371, %v396
    %v400 = vsub.f32 %v374, %v396
    %v401 = vmul.f32 %v397, %v397
    %v402 = vmul.f32 %v398, %v398
    %v403 = vmul.f32 %v399, %v399
    %v404 = vmul.f32 %v400, %v400
    %v405 = vsel %vm114, %v401, 0.0
    %v406 = vsel %vm114, %v402, 0.0
    %v407 = vadd.f32 %v405, %v406
    %v408 = vsel %vm114, %v403, 0.0
    %v409 = vadd.f32 %v407, %v408
    %v410 = vsel %vm220, %v404, 0.0
    %v411 = vadd.f32 %v409, %v410
    %v412 = vrot.slane %v411, 4
    %v413 = vadd.f32 %v411, %v412
    %v414 = vrot.slane %v413, 2
    %v415 = vadd.f32 %v413, %v414
    %v416 = vrot.slane %v415, 1
    %v417 = vadd.f32 %v415, %v416
    %v418 = vmul.f32 %v417, %v395
    %v419 = vadd.f32 %v418, 1e-05
    %v420 = vrsqrt.pop %v419
    %v421 = vmul.f32 %v420, %v419
    %v422 = vmul.f32 %v421, %v420
    %v423 = vmul.f32 0.5, %v422
    %v424 = vsub.f32 1.5, %v423
    %v425 = vmul.f32 %v420, %v424
    %vm426 = vweird.f32 %v419
    %vm427 = vweird.f32 %v420
    %vm428 = vmor %vm426, %vm427
    %v429 = vsel %vm428, %v420, %v425
    %v430 = vmul.f32 %v397, %v429
    %v431 = vmul.f32 %v398, %v429
    %v432 = vmul.f32 %v399, %v429
    %v433 = vmul.f32 %v400, %v429
    %vm434 = vcmp.ge.f32.partialorder %v430, 0.0
    %vm435 = vcmp.ge.f32.partialorder %v431, 0.0
    %vm436 = vcmp.ge.f32.partialorder %v432, 0.0
    %vm437 = vcmp.ge.f32.partialorder %v433, 0.0
    %v438 = vmul.f32 %v430, 0.01
    %v439 = vmul.f32 %v431, 0.01
    %v440 = vmul.f32 %v432, 0.01
    %v441 = vmul.f32 %v433, 0.01
    %v442 = vsel %vm434, %v430, %v438
    %v443 = vsel %vm435, %v431, %v439
    %v444 = vsel %vm436, %v432, %v440
    %v445 = vsel %vm437, %v433, %v441
    %vm446 = vcmask 254976
    %447 = vst.msk [vmem:[#allocation3] sm:$0x3] %vm446, 0.0
    %448 = vst.msk [vmem:[#allocation3 + $0x2] sm:$0xff] %vm114, %v442
    %vm449 = vcmask 259072
    %450 = vst.msk [vmem:[#allocation3 + $0xa] sm:$0x3f] %vm449, %v443
    %451 = vst.msk [vmem:[#allocation3 + $0x10] sm:$0x3] %vm446, 0.0
    %vm452 = vcmask 261126
    %453 = vst.msk [vmem:[#allocation3 + $0xc] sm:$0xc0] %vm452, %v443
    %454 = vst.msk [vmem:[#allocation3 + $0x14] sm:$0xff] %vm114, %v444
    %455 = vst.msk [vmem:[#allocation3 + $0x1c] sm:$0xf] %vm220, %v445
    %v456 = vld [vmem:[#allocation3] sm:$0xff]
    %v457 = vld [vmem:[#allocation3 + $0x8] sm:$0x3f]
    %v458 = vld [vmem:[#allocation3 + $0x1] sm:$0xff]
    %v459 = vld [vmem:[#allocation3 + $0x9] sm:$0x3f]
    %v460 = vld [vmem:[#allocation3 + $0x2] sm:$0xff]
    %v461 = vld [vmem:[#allocation3 + $0xa] sm:$0x3f]
    %464 = vrot.lane.b32.xlu0 %v458, 32
    %v465 = vpop.permute.xlu0 %464
    %466 = vrot.lane.b32.xlu0 %v459, 32
    %v467 = vpop.permute.xlu0 %466
    %472 = vrot.lane.b32.xlu0 %v460, 64
    %v473 = vpop.permute.xlu0 %472
    %474 = vrot.lane.b32.xlu0 %v461, 64
    %v475 = vpop.permute.xlu0 %474
    %v478 = vsel %vm114, %v456, %v465
    %v479 = vsel %vm114, %v457, %v467
    %v480 = vsel %vm269, %v478, %v473
    %v481 = vsel %vm269, %v479, %v475
    %v482 = vld [vmem:[#allocation3 + $0x10] sm:$0xff]
    %v483 = vld [vmem:[#allocation3 + $0x18] sm:$0x3f]
    %v484 = vld [vmem:[#allocation3 + $0x11] sm:$0xff]
    %v485 = vld [vmem:[#allocation3 + $0x19] sm:$0x3f]
    %v486 = vld [vmem:[#allocation3 + $0x12] sm:$0xff]
    %v487 = vld [vmem:[#allocation3 + $0x1a] sm:$0x3f]
    %490 = vrot.lane.b32.xlu0 %v484, 32
    %v491 = vpop.permute.xlu0 %490
    %492 = vrot.lane.b32.xlu0 %v485, 32
    %v493 = vpop.permute.xlu0 %492
    %498 = vrot.lane.b32.xlu0 %v486, 64
    %v499 = vpop.permute.xlu0 %498
    %500 = vrot.lane.b32.xlu0 %v487, 64
    %v501 = vpop.permute.xlu0 %500
    %v504 = vsel %vm114, %v482, %v491
    %v505 = vsel %vm114, %v483, %v493
    %v506 = vsel %vm269, %v504, %v499
    %v507 = vsel %vm269, %v505, %v501
    %v510 = vrot.slane %v506, 2
    %v511 = vrot.slane %v507, 2
    %v512 = vsel %vm323, %v510, %v511
    %v514 = vsel %vm323, %v481, %v510
    %v515 = vld [vmem:[%s3] sm:$0xff]
    %v516 = vld [vmem:[%s3 + $0x8] sm:$0xff]
    %v517 = vld [vmem:[%s3 + $0x10] sm:$0xff]
    %v518 = vld [vmem:[%s3 + $0x18] sm:$0xff]
    %v519 = vld [vmem:[%s3 + $0x20] sm:$0xff]
    %v520 = vld [vmem:[%s3 + $0x28] sm:$0xff]
    %v521 = vld [vmem:[%s3 + $0x30] sm:$0xff]
    %v522 = vld [vmem:[%s3 + $0x38] sm:$0xff]
    %v523 = vld [vmem:[%s3 + $0x40] sm:$0xff]
    %v524 = vld [vmem:[%s3 + $0x48] sm:$0xff]
    %v525 = vld [vmem:[%s3 + $0x50] sm:$0xff]
    %v526 = vld [vmem:[%s3 + $0x58] sm:$0xff]
    %v528 = vsel %vm272, %v480, 0
    %v531 = vsel %vm272, %v514, 0
    %v533 = vsel %vm272, %v512, 0
    %v535 = vsel %vm272, %v511, 0
    %537 = vmatpush.msra.mxu0 0.0
    %538 = vmatpush.msra.mxu0 0.0
    %539 = vmatpush.msra.mxu0 0.0
    %540 = vmatpush.msra.mxu0 0.0
    %541 = vmatpush.msra.mxu0 %v526
    %542 = vmatpush.msra.mxu0 %v525
    %543 = vmatpush.msra.mxu0 %v524
    %544 = vmatpush.msra.mxu0 %v523
    %545 = vmatpush.msra.mxu0 %v522
    %546 = vmatpush.msra.mxu0 %v521
    %547 = vmatpush.msra.mxu0 %v520
    %548 = vmatpush.msra.mxu0 %v519
    %549 = vmatpush.msra.mxu0 %v518
    %550 = vmatpush.msra.mxu0 %v517
    %551 = vmatpush.msra.mxu0 %v516
    %552 = vmatpush.msra.mxu0 %v515
    %553 = vmatmul.f32.gmra.mxu0 %v528
    %v554 = vpop.f32.mrf.mxu0
    %v555 = vadd.f32 0.0, %v554
    %556 = vmatmul.f32.gmra.mxu0 %v531
    %v557 = vpop.f32.mrf.mxu0
    %v558 = vadd.f32 0.0, %v557
    %559 = vmatmul.f32.gmra.mxu0 %v533
    %v560 = vpop.f32.mrf.mxu0
    %v561 = vadd.f32 0.0, %v560
    %562 = vmatmul.f32.gmra.mxu0 %v535
    %v563 = vpop.f32.mrf.mxu0
    %v564 = vadd.f32 0.0, %v563
    %565 = vdwg.mxu0
    %v566 = vsel %vm114, %v555, 0.0
    %v567 = vsel %vm114, %v558, 0.0
    %v568 = vadd.f32 %v566, %v567
    %v569 = vsel %vm114, %v561, 0.0
    %v570 = vadd.f32 %v568, %v569
    %v571 = vsel %vm220, %v564, 0.0
    %v572 = vadd.f32 %v570, %v571
    %v573 = vrot.slane %v572, 4
    %v574 = vadd.f32 %v572, %v573
    %v575 = vrot.slane %v574, 2
    %v576 = vadd.f32 %v574, %v575
    %v577 = vrot.slane %v576, 1
    %v578 = vadd.f32 %v576, %v577
    %v579 = vmul.f32 %v578, %v395
    %v580 = vsub.f32 %v555, %v579
    %v581 = vsub.f32 %v558, %v579
    %v582 = vsub.f32 %v561, %v579
    %v583 = vsub.f32 %v564, %v579
    %v584 = vmul.f32 %v580, %v580
    %v585 = vmul.f32 %v581, %v581
    %v586 = vmul.f32 %v582, %v582
    %v587 = vmul.f32 %v583, %v583
    %v588 = vsel %vm114, %v584, 0.0
    %v589 = vsel %vm114, %v585, 0.0
    %v590 = vadd.f32 %v588, %v589
    %v591 = vsel %vm114, %v586, 0.0
    %v592 = vadd.f32 %v590, %v591
    %v593 = vsel %vm220, %v587, 0.0
    %v594 = vadd.f32 %v592, %v593
    %v595 = vrot.slane %v594, 4
    %v596 = vadd.f32 %v594, %v595
    %v597 = vrot.slane %v596, 2
    %v598 = vadd.f32 %v596, %v597
    %v599 = vrot.slane %v598, 1
    %v600 = vadd.f32 %v598, %v599
    %v601 = vmul.f32 %v600, %v395
    %v602 = vadd.f32 %v601, 1e-05
    %v603 = vrsqrt.pop %v602
    %v604 = vmul.f32 %v603, %v602
    %v605 = vmul.f32 %v604, %v603
    %v606 = vmul.f32 0.5, %v605
    %v607 = vsub.f32 1.5, %v606
    %v608 = vmul.f32 %v603, %v607
    %vm609 = vweird.f32 %v602
    %vm610 = vweird.f32 %v603
    %vm611 = vmor %vm609, %vm610
    %v612 = vsel %vm611, %v603, %v608
    %v613 = vmul.f32 %v580, %v612
    %v614 = vmul.f32 %v581, %v612
    %v615 = vmul.f32 %v582, %v612
    %v616 = vmul.f32 %v583, %v612
    %vm617 = vcmp.ge.f32.partialorder %v613, 0.0
    %vm618 = vcmp.ge.f32.partialorder %v614, 0.0
    %vm619 = vcmp.ge.f32.partialorder %v615, 0.0
    %vm620 = vcmp.ge.f32.partialorder %v616, 0.0
    %v621 = vmul.f32 %v613, 0.01
    %v622 = vmul.f32 %v614, 0.01
    %v623 = vmul.f32 %v615, 0.01
    %v624 = vmul.f32 %v616, 0.01
    %v625 = vsel %vm617, %v613, %v621
    %v626 = vsel %vm618, %v614, %v622
    %v627 = vsel %vm619, %v615, %v623
    %v628 = vsel %vm620, %v616, %v624
    %629 = vst.msk [vmem:[#allocation4] sm:$0x7] %vm215, 0.0
    %630 = vst.msk [vmem:[#allocation4 + $0x3] sm:$0xff] %vm114, %v625
    %631 = vst.msk [vmem:[#allocation4 + $0xb] sm:$0x3f] %vm449, %v626
    %632 = vst.msk [vmem:[#allocation4 + $0x11] sm:$0x7] %vm215, 0.0
    %633 = vst.msk [vmem:[#allocation4 + $0xe] sm:$0xc0] %vm452, %v626
    %634 = vst.msk [vmem:[#allocation4 + $0x16] sm:$0xff] %vm114, %v627
    %635 = vst.msk [vmem:[#allocation4 + $0x1e] sm:$0xf] %vm220, %v628
    %v636 = vld [vmem:[#allocation4] sm:$0xff]
    %v637 = vld [vmem:[#allocation4 + $0x8] sm:$0x3f]
    %v638 = vld [vmem:[#allocation4 + $0x1] sm:$0xff]
    %v639 = vld [vmem:[#allocation4 + $0x9] sm:$0x3f]
    %v640 = vld [vmem:[#allocation4 + $0x2] sm:$0xff]
    %v641 = vld [vmem:[#allocation4 + $0xa] sm:$0x3f]
    %v642 = vld [vmem:[#allocation4 + $0x3] sm:$0xff]
    %v643 = vld [vmem:[#allocation4 + $0xb] sm:$0x3f]
    %646 = vrot.lane.b32.xlu0 %v638, 32
    %v647 = vpop.permute.xlu0 %646
    %648 = vrot.lane.b32.xlu0 %v639, 32
    %v649 = vpop.permute.xlu0 %648
    %654 = vrot.lane.b32.xlu0 %v640, 64
    %v655 = vpop.permute.xlu0 %654
    %656 = vrot.lane.b32.xlu0 %v641, 64
    %v657 = vpop.permute.xlu0 %656
    %662 = vrot.lane.b32.xlu0 %v642, 96
    %v663 = vpop.permute.xlu0 %662
    %664 = vrot.lane.b32.xlu0 %v643, 96
    %v665 = vpop.permute.xlu0 %664
    %v668 = vsel %vm114, %v636, %v647
    %v669 = vsel %vm114, %v637, %v649
    %v670 = vsel %vm269, %v668, %v655
    %v671 = vsel %vm269, %v669, %v657
    %v672 = vsel %vm272, %v670, %v663
    %v673 = vsel %vm272, %v671, %v665
    %v674 = vld [vmem:[#allocation4 + $0x11] sm:$0xff]
    %v675 = vld [vmem:[#allocation4 + $0x19] sm:$0x3f]
    %v676 = vld [vmem:[#allocation4 + $0x12] sm:$0xff]
    %v677 = vld [vmem:[#allocation4 + $0x1a] sm:$0x3f]
    %v678 = vld [vmem:[#allocation4 + $0x13] sm:$0xff]
    %v679 = vld [vmem:[#allocation4 + $0x1b] sm:$0x3f]
    %v680 = vld [vmem:[#allocation4 + $0x14] sm:$0xff]
    %v681 = vld [vmem:[#allocation4 + $0x1c] sm:$0x3f]
    %684 = vrot.lane.b32.xlu0 %v676, 32
    %v685 = vpop.permute.xlu0 %684
    %686 = vrot.lane.b32.xlu0 %v677, 32
    %v687 = vpop.permute.xlu0 %686
    %692 = vrot.lane.b32.xlu0 %v678, 64
    %v693 = vpop.permute.xlu0 %692
    %694 = vrot.lane.b32.xlu0 %v679, 64
    %v695 = vpop.permute.xlu0 %694
    %700 = vrot.lane.b32.xlu0 %v680, 96
    %v701 = vpop.permute.xlu0 %700
    %702 = vrot.lane.b32.xlu0 %v681, 96
    %v703 = vpop.permute.xlu0 %702
    %v706 = vsel %vm114, %v674, %v685
    %v707 = vsel %vm114, %v675, %v687
    %v708 = vsel %vm269, %v706, %v693
    %v709 = vsel %vm269, %v707, %v695
    %v710 = vsel %vm272, %v708, %v701
    %v711 = vsel %vm272, %v709, %v703
    %v714 = vrot.slane %v710, 2
    %v715 = vrot.slane %v711, 2
    %v716 = vsel %vm323, %v714, %v715
    %v720 = vsel %vm323, %v673, %v714
    %v721 = vld [vmem:[%s4] sm:$0xff]
    %v722 = vld [vmem:[%s4 + $0x8] sm:$0xff]
    %v723 = vld [vmem:[%s4 + $0x10] sm:$0xff]
    %v724 = vld [vmem:[%s4 + $0x18] sm:$0xff]
    %v725 = vld [vmem:[%s4 + $0x20] sm:$0xff]
    %v726 = vld [vmem:[%s4 + $0x28] sm:$0xff]
    %v727 = vld [vmem:[%s4 + $0x30] sm:$0xff]
    %v728 = vld [vmem:[%s4 + $0x38] sm:$0xff]
    %v729 = vld [vmem:[%s4 + $0x40] sm:$0xff]
    %v730 = vld [vmem:[%s4 + $0x48] sm:$0xff]
    %v731 = vld [vmem:[%s4 + $0x50] sm:$0xff]
    %v732 = vld [vmem:[%s4 + $0x58] sm:$0xff]
    %v733 = vld [vmem:[%s4 + $0x60] sm:$0xff]
    %v734 = vld [vmem:[%s4 + $0x68] sm:$0xff]
    %v735 = vld [vmem:[%s4 + $0x70] sm:$0xff]
    %v736 = vld [vmem:[%s4 + $0x78] sm:$0xff]
    %737 = vmatpush.msra.mxu0 %v736
    %738 = vmatpush.msra.mxu0 %v735
    %739 = vmatpush.msra.mxu0 %v734
    %740 = vmatpush.msra.mxu0 %v733
    %741 = vmatpush.msra.mxu0 %v732
    %742 = vmatpush.msra.mxu0 %v731
    %743 = vmatpush.msra.mxu0 %v730
    %744 = vmatpush.msra.mxu0 %v729
    %745 = vmatpush.msra.mxu0 %v728
    %746 = vmatpush.msra.mxu0 %v727
    %747 = vmatpush.msra.mxu0 %v726
    %748 = vmatpush.msra.mxu0 %v725
    %749 = vmatpush.msra.mxu0 %v724
    %750 = vmatpush.msra.mxu0 %v723
    %751 = vmatpush.msra.mxu0 %v722
    %752 = vmatpush.msra.mxu0 %v721
    %753 = vmatmul.f32.gmra.mxu0 %v672
    %v754 = vpop.f32.mrf.mxu0
    %v755 = vadd.f32 0.0, %v754
    %756 = vmatmul.f32.gmra.mxu0 %v720
    %v757 = vpop.f32.mrf.mxu0
    %v758 = vadd.f32 0.0, %v757
    %759 = vmatmul.f32.gmra.mxu0 %v716
    %v760 = vpop.f32.mrf.mxu0
    %v761 = vadd.f32 0.0, %v760
    %762 = vmatmul.f32.gmra.mxu0 %v715
    %v763 = vpop.f32.mrf.mxu0
    %v764 = vadd.f32 0.0, %v763
    %765 = vdwg.mxu0
    %v766 = vsel %vm114, %v755, 0.0
    %v767 = vsel %vm114, %v758, 0.0
    %v768 = vadd.f32 %v766, %v767
    %v769 = vsel %vm114, %v761, 0.0
    %v770 = vadd.f32 %v768, %v769
    %v771 = vsel %vm220, %v764, 0.0
    %v772 = vadd.f32 %v770, %v771
    %v773 = vrot.slane %v772, 4
    %v774 = vadd.f32 %v772, %v773
    %v775 = vrot.slane %v774, 2
    %v776 = vadd.f32 %v774, %v775
    %v777 = vrot.slane %v776, 1
    %v778 = vadd.f32 %v776, %v777
    %v779 = vmul.f32 %v778, %v395
    %v780 = vsub.f32 %v755, %v779
    %v781 = vsub.f32 %v758, %v779
    %v782 = vsub.f32 %v761, %v779
    %v783 = vsub.f32 %v764, %v779
    %v784 = vmul.f32 %v780, %v780
    %v785 = vmul.f32 %v781, %v781
    %v786 = vmul.f32 %v782, %v782
    %v787 = vmul.f32 %v783, %v783
    %v788 = vsel %vm114, %v784, 0.0
    %v789 = vsel %vm114, %v785, 0.0
    %v790 = vadd.f32 %v788, %v789
    %v791 = vsel %vm114, %v786, 0.0
    %v792 = vadd.f32 %v790, %v791
    %v793 = vsel %vm220, %v787, 0.0
    %v794 = vadd.f32 %v792, %v793
    %v795 = vrot.slane %v794, 4
    %v796 = vadd.f32 %v794, %v795
    %v797 = vrot.slane %v796, 2
    %v798 = vadd.f32 %v796, %v797
    %v799 = vrot.slane %v798, 1
    %v800 = vadd.f32 %v798, %v799
    %v801 = vmul.f32 %v800, %v395
    %v802 = vadd.f32 %v801, 1e-05
    %v803 = vrsqrt.pop %v802
    %v804 = vmul.f32 %v803, %v802
    %v805 = vmul.f32 %v804, %v803
    %v806 = vmul.f32 0.5, %v805
    %v807 = vsub.f32 1.5, %v806
    %v808 = vmul.f32 %v803, %v807
    %vm809 = vweird.f32 %v802
    %vm810 = vweird.f32 %v803
    %vm811 = vmor %vm809, %vm810
    %v812 = vsel %vm811, %v803, %v808
    %v813 = vmul.f32 %v780, %v812
    %v814 = vmul.f32 %v781, %v812
    %v815 = vmul.f32 %v782, %v812
    %v816 = vmul.f32 %v783, %v812
    %vm817 = vcmp.ge.f32.partialorder %v813, 0.0
    %vm818 = vcmp.ge.f32.partialorder %v814, 0.0
    %vm819 = vcmp.ge.f32.partialorder %v815, 0.0
    %vm820 = vcmp.ge.f32.partialorder %v816, 0.0
    %v821 = vmul.f32 %v813, 0.01
    %v822 = vmul.f32 %v814, 0.01
    %v823 = vmul.f32 %v815, 0.01
    %v824 = vmul.f32 %v816, 0.01
    %v825 = vsel %vm817, %v813, %v821
    %v826 = vsel %vm818, %v814, %v822
    %v827 = vsel %vm819, %v815, %v823
    %v828 = vsel %vm820, %v816, %v824
    %v829 = vld [vmem:[%s5] sm:$0xff]
    %v830 = vld [vmem:[%s5 + $0x8] sm:$0xff]
    %v831 = vld [vmem:[%s5 + $0x10] sm:$0xff]
    %v832 = vld [vmem:[%s5 + $0x18] sm:$0xff]
    %v833 = vld [vmem:[%s7] sm:$0x1]
    %v835 = vperm.slane %v833, 0
    %v838 = vsel %vm114, %v825, 0
    %v841 = vsel %vm114, %v826, 0
    %v844 = vsel %vm114, %v827, 0
    %v847 = vsel %vm114, %v828, 0
    %849 = vmatpush.msra.mxu0 0.0
    %850 = vmatpush.msra.mxu0 0.0
    %851 = vmatpush.msra.mxu0 0.0
    %852 = vmatpush.msra.mxu0 0.0
    %853 = vmatpush.msra.mxu0 0.0
    %854 = vmatpush.msra.mxu0 0.0
    %855 = vmatpush.msra.mxu0 0.0
    %856 = vmatpush.msra.mxu0 0.0
    %857 = vmatpush.msra.mxu0 0.0
    %858 = vmatpush.msra.mxu0 0.0
    %859 = vmatpush.msra.mxu0 0.0
    %860 = vmatpush.msra.mxu0 0.0
    %861 = vmatpush.msra.mxu0 %v832
    %862 = vmatpush.msra.mxu0 %v831
    %863 = vmatpush.msra.mxu0 %v830
    %864 = vmatpush.msra.mxu0 %v829
    %865 = vmatmul.f32.gmra.mxu0 %v838
    %v866 = vpop.f32.mrf.mxu0
    %v867 = vadd.f32 %v835, %v866
    %868 = vmatmul.f32.gmra.mxu0 %v841
    %v869 = vpop.f32.mrf.mxu0
    %v870 = vadd.f32 %v835, %v869
    %871 = vmatmul.f32.gmra.mxu0 %v844
    %v872 = vpop.f32.mrf.mxu0
    %v873 = vadd.f32 %v835, %v872
    %874 = vmatmul.f32.gmra.mxu0 %v847
    %v875 = vpop.f32.mrf.mxu0
    %876 = vdwg.mxu0
    %v877 = vld [vmem:[%s6] sm:$0xff]
    %v878 = vld [vmem:[%s6 + $0x8] sm:$0xff]
    %v879 = vld [vmem:[%s8] sm:$0x1]
    %v880 = vld [vmem:[%s9] sm:$0x3]
    %v882 = vrot.slane %v870, 5
    %vm884 = vcmask 1040384
    %v885 = vsel %vm884, %v867, %v882
    %v887 = vperm.slane %v879, 0
    %vm889 = vcmask 130048
    %v891 = vsel %vm889, %v880, 0
    %893 = vmatpush.msra.mxu0 0.0
    %894 = vmatpush.msra.mxu0 0.0
    %895 = vmatpush.msra.mxu0 0.0
    %896 = vmatpush.msra.mxu0 0.0
    %897 = vmatpush.msra.mxu0 0.0
    %898 = vmatpush.msra.mxu0 0.0
    %899 = vmatpush.msra.mxu0 0.0
    %900 = vmatpush.msra.mxu0 0.0
    %901 = vmatpush.msra.mxu0 0.0
    %902 = vmatpush.msra.mxu0 0.0
    %903 = vmatpush.msra.mxu0 0.0
    %904 = vmatpush.msra.mxu0 0.0
    %905 = vmatpush.msra.mxu0 0.0
    %906 = vmatpush.msra.mxu0 0.0
    %907 = vmatpush.msra.mxu0 %v878
    %908 = vmatpush.msra.mxu0 %v877
    %909 = vmatmul.f32.gmra.mxu0 %v891
    %v910 = vpop.f32.mrf.mxu0
    %v911 = vadd.f32 %v887, %v910
    %912 = vdwg.mxu0
    %v913 = vadd.f32 %v885, %v911
    %v914 = vxor.u32 %v913, 2147483648
    %v915 = vmul.f32 %v914, 1.442695
    %v916 = vpow.pop %v915
    %v917 = vadd.f32 %v916, 1.0
    %v918 = vrcp.pop %v917
    %v919 = vmul.f32 %v917, %v918
    %v920 = vsub.f32 1.0, %v919
    %v921 = vmul.f32 %v918, %v920
    %v922 = vadd.f32 %v918, %v921
    %vm923 = vweird.f32 %v917
    %vm924 = vweird.f32 %v918
    %vm925 = vmor %vm923, %vm924
    %v926 = vsel %vm925, %v918, %v922
    %v927 = vand.u32 2147483647, %v917
    %vm928 = vcmp.eq.f32.partialorder %v927, 8.507059e+37
    %v929 = vand.u32 %v917, 2147483648
    %v930 = vor.u32 1.1754944e-38, %v929
    %v931 = vsel %vm928, %v930, %v926
    %v932 = vmul.f32 1.0, %v931
    %934 = vrot.lane.b32.xlu0 %v911, 96
    %v935 = vpop.permute.xlu0 %934
    %v937 = vmul.f32 %v932, %v935
    %939 = vrot.lane.b32.xlu0 %v937, 32
    %v940 = vpop.permute.xlu0 %939
    %v942 = vadd.f32 %v885, %v940
    %v943 = vtanh.pop %v942
    %v944 = vsub.f32 1.0, %v932
    %946 = vrot.lane.b32.xlu0 %v943, 112
    %v947 = vpop.permute.xlu0 %946
    %v949 = vmul.f32 %v944, %v947
    %950 = vrot.lane.b32.xlu0 %v880, 16
    %v951 = vpop.permute.xlu0 %950
    %v953 = vmul.f32 %v932, %v951
    %v954 = vadd.f32 %v949, %v953
    %v956 = vrot.slane %v867, 1
    %v958 = vrot.slane %v870, 6
    %v960 = vsel %vm884, %v956, %v958
    %962 = vrot.lane.b32.xlu0 %v954, 112
    %v963 = vpop.permute.xlu0 %962
    %v964 = vsel %vm889, %v963, 0
    %966 = vmatpush.msra.mxu0 0.0
    %967 = vmatpush.msra.mxu0 0.0
    %968 = vmatpush.msra.mxu0 0.0
    %969 = vmatpush.msra.mxu0 0.0
    %970 = vmatpush.msra.mxu0 0.0
    %971 = vmatpush.msra.mxu0 0.0
    %972 = vmatpush.msra.mxu0 0.0
    %973 = vmatpush.msra.mxu0 0.0
    %974 = vmatpush.msra.mxu0 0.0
    %975 = vmatpush.msra.mxu0 0.0
    %976 = vmatpush.msra.mxu0 0.0
    %977 = vmatpush.msra.mxu0 0.0
    %978 = vmatpush.msra.mxu0 0.0
    %979 = vmatpush.msra.mxu0 0.0
    %980 = vmatpush.msra.mxu0 %v878
    %981 = vmatpush.msra.mxu0 %v877
    %982 = vmatmul.f32.gmra.mxu0 %v964
    %v983 = vpop.f32.mrf.mxu0
    %v984 = vadd.f32 %v887, %v983
    %985 = vdwg.mxu0
    %v986 = vadd.f32 %v960, %v984
    %v987 = vxor.u32 %v986, 2147483648
    %v988 = vmul.f32 %v987, 1.442695
    %v989 = vpow.pop %v988
    %v990 = vadd.f32 %v989, 1.0
    %v991 = vrcp.pop %v990
    %v992 = vmul.f32 %v990, %v991
    %v993 = vsub.f32 1.0, %v992
    %v994 = vmul.f32 %v991, %v993
    %v995 = vadd.f32 %v991, %v994
    %vm996 = vweird.f32 %v990
    %vm997 = vweird.f32 %v991
    %vm998 = vmor %vm996, %vm997
    %v999 = vsel %vm998, %v991, %v995
    %v1000 = vand.u32 2147483647, %v990
    %vm1001 = vcmp.eq.f32.partialorder %v1000, 8.507059e+37
    %v1002 = vand.u32 %v990, 2147483648
    %v1003 = vor.u32 1.1754944e-38, %v1002
    %v1004 = vsel %vm1001, %v1003, %v999
    %v1005 = vmul.f32 1.0, %v1004
    %1007 = vrot.lane.b32.xlu0 %v984, 96
    %v1008 = vpop.permute.xlu0 %1007
    %v1010 = vmul.f32 %v1005, %v1008
    %1012 = vrot.lane.b32.xlu0 %v1010, 32
    %v1013 = vpop.permute.xlu0 %1012
    %v1015 = vadd.f32 %v960, %v1013
    %v1016 = vtanh.pop %v1015
    %v1017 = vsub.f32 1.0, %v1005
    %1019 = vrot.lane.b32.xlu0 %v1016, 112
    %v1020 = vpop.permute.xlu0 %1019
    %v1022 = vmul.f32 %v1017, %v1020
    %v1023 = vmul.f32 %v1005, %v954
    %v1024 = vadd.f32 %v1022, %v1023
    %v1025 = vrot.slane %v867, 2
    %v1028 = vrot.slane %v873, 7
    %v1030 = vsel %vm884, %v1025, %v1028
    %1032 = vrot.lane.b32.xlu0 %v1024, 112
    %v1033 = vpop.permute.xlu0 %1032
    %v1034 = vsel %vm889, %v1033, 0
    %1036 = vmatpush.msra.mxu0 0.0
    %1037 = vmatpush.msra.mxu0 0.0
    %1038 = vmatpush.msra.mxu0 0.0
    %1039 = vmatpush.msra.mxu0 0.0
    %1040 = vmatpush.msra.mxu0 0.0
    %1041 = vmatpush.msra.mxu0 0.0
    %1042 = vmatpush.msra.mxu0 0.0
    %1043 = vmatpush.msra.mxu0 0.0
    %1044 = vmatpush.msra.mxu0 0.0
    %1045 = vmatpush.msra.mxu0 0.0
    %1046 = vmatpush.msra.mxu0 0.0
    %1047 = vmatpush.msra.mxu0 0.0
    %1048 = vmatpush.msra.mxu0 0.0
    %1049 = vmatpush.msra.mxu0 0.0
    %1050 = vmatpush.msra.mxu0 %v878
    %1051 = vmatpush.msra.mxu0 %v877
    %1052 = vmatmul.f32.gmra.mxu0 %v1034
    %v1053 = vpop.f32.mrf.mxu0
    %v1054 = vadd.f32 %v887, %v1053
    %1055 = vdwg.mxu0
    %v1056 = vadd.f32 %v1030, %v1054
    %v1057 = vxor.u32 %v1056, 2147483648
    %v1058 = vmul.f32 %v1057, 1.442695
    %v1059 = vpow.pop %v1058
    %v1060 = vadd.f32 %v1059, 1.0
    %v1061 = vrcp.pop %v1060
    %v1062 = vmul.f32 %v1060, %v1061
    %v1063 = vsub.f32 1.0, %v1062
    %v1064 = vmul.f32 %v1061, %v1063
    %v1065 = vadd.f32 %v1061, %v1064
    %vm1066 = vweird.f32 %v1060
    %vm1067 = vweird.f32 %v1061
    %vm1068 = vmor %vm1066, %vm1067
    %v1069 = vsel %vm1068, %v1061, %v1065
    %v1070 = vand.u32 2147483647, %v1060
    %vm1071 = vcmp.eq.f32.partialorder %v1070, 8.507059e+37
    %v1072 = vand.u32 %v1060, 2147483648
    %v1073 = vor.u32 1.1754944e-38, %v1072
    %v1074 = vsel %vm1071, %v1073, %v1069
    %v1075 = vmul.f32 1.0, %v1074
    %1077 = vrot.lane.b32.xlu0 %v1054, 96
    %v1078 = vpop.permute.xlu0 %1077
    %v1080 = vmul.f32 %v1075, %v1078
    %1082 = vrot.lane.b32.xlu0 %v1080, 32
    %v1083 = vpop.permute.xlu0 %1082
    %v1085 = vadd.f32 %v1030, %v1083
    %v1086 = vtanh.pop %v1085
    %v1087 = vsub.f32 1.0, %v1075
    %1089 = vrot.lane.b32.xlu0 %v1086, 112
    %v1090 = vpop.permute.xlu0 %1089
    %v1092 = vmul.f32 %v1087, %v1090
    %v1093 = vmul.f32 %v1075, %v1024
    %v1094 = vadd.f32 %v1092, %v1093
    %v1095 = vrot.slane %v867, 3
    %v1097 = vsel %vm884, %v1095, %v873
    %1099 = vrot.lane.b32.xlu0 %v1094, 112
    %v1100 = vpop.permute.xlu0 %1099
    %v1101 = vsel %vm889, %v1100, 0
    %1103 = vmatpush.msra.mxu0 0.0
    %1104 = vmatpush.msra.mxu0 0.0
    %1105 = vmatpush.msra.mxu0 0.0
    %1106 = vmatpush.msra.mxu0 0.0
    %1107 = vmatpush.msra.mxu0 0.0
    %1108 = vmatpush.msra.mxu0 0.0
    %1109 = vmatpush.msra.mxu0 0.0
    %1110 = vmatpush.msra.mxu0 0.0
    %1111 = vmatpush.msra.mxu0 0.0
    %1112 = vmatpush.msra.mxu0 0.0
    %1113 = vmatpush.msra.mxu0 0.0
    %1114 = vmatpush.msra.mxu0 0.0
    %1115 = vmatpush.msra.mxu0 0.0
    %1116 = vmatpush.msra.mxu0 0.0
    %1117 = vmatpush.msra.mxu0 %v878
    %1118 = vmatpush.msra.mxu0 %v877
    %1119 = vmatmul.f32.gmra.mxu0 %v1101
    %v1120 = vpop.f32.mrf.mxu0
    %v1121 = vadd.f32 %v887, %v1120
    %1122 = vdwg.mxu0
    %v1123 = vadd.f32 %v1097, %v1121
    %v1124 = vxor.u32 %v1123, 2147483648
    %v1125 = vmul.f32 %v1124, 1.442695
    %v1126 = vpow.pop %v1125
    %v1127 = vadd.f32 %v1126, 1.0
    %v1128 = vrcp.pop %v1127
    %v1129 = vmul.f32 %v1127, %v1128
    %v1130 = vsub.f32 1.0, %v1129
    %v1131 = vmul.f32 %v1128, %v1130
    %v1132 = vadd.f32 %v1128, %v1131
    %vm1133 = vweird.f32 %v1127
    %vm1134 = vweird.f32 %v1128
    %vm1135 = vmor %vm1133, %vm1134
    %v1136 = vsel %vm1135, %v1128, %v1132
    %v1137 = vand.u32 2147483647, %v1127
    %vm1138 = vcmp.eq.f32.partialorder %v1137, 8.507059e+37
    %v1139 = vand.u32 %v1127, 2147483648
    %v1140 = vor.u32 1.1754944e-38, %v1139
    %v1141 = vsel %vm1138, %v1140, %v1136
    %v1142 = vmul.f32 1.0, %v1141
    %1144 = vrot.lane.b32.xlu0 %v1121, 96
    %v1145 = vpop.permute.xlu0 %1144
    %v1147 = vmul.f32 %v1142, %v1145
    %1149 = vrot.lane.b32.xlu0 %v1147, 32
    %v1150 = vpop.permute.xlu0 %1149
    %v1152 = vadd.f32 %v1097, %v1150
    %v1153 = vtanh.pop %v1152
    %v1154 = vsub.f32 1.0, %v1142
    %1156 = vrot.lane.b32.xlu0 %v1153, 112
    %v1157 = vpop.permute.xlu0 %1156
    %v1159 = vmul.f32 %v1154, %v1157
    %v1160 = vmul.f32 %v1142, %v1094
    %v1161 = vadd.f32 %v1159, %v1160
    %v1162 = vrot.slane %v867, 4
    %v1164 = vrot.slane %v873, 1
    %v1166 = vsel %vm884, %v1162, %v1164
    %1168 = vrot.lane.b32.xlu0 %v1161, 112
    %v1169 = vpop.permute.xlu0 %1168
    %v1170 = vsel %vm889, %v1169, 0
    %1172 = vmatpush.msra.mxu0 0.0
    %1173 = vmatpush.msra.mxu0 0.0
    %1174 = vmatpush.msra.mxu0 0.0
    %1175 = vmatpush.msra.mxu0 0.0
    %1176 = vmatpush.msra.mxu0 0.0
    %1177 = vmatpush.msra.mxu0 0.0
    %1178 = vmatpush.msra.mxu0 0.0
    %1179 = vmatpush.msra.mxu0 0.0
    %1180 = vmatpush.msra.mxu0 0.0
    %1181 = vmatpush.msra.mxu0 0.0
    %1182 = vmatpush.msra.mxu0 0.0
    %1183 = vmatpush.msra.mxu0 0.0
    %1184 = vmatpush.msra.mxu0 0.0
    %1185 = vmatpush.msra.mxu0 0.0
    %1186 = vmatpush.msra.mxu0 %v878
    %1187 = vmatpush.msra.mxu0 %v877
    %1188 = vmatmul.f32.gmra.mxu0 %v1170
    %v1189 = vpop.f32.mrf.mxu0
    %v1190 = vadd.f32 %v887, %v1189
    %1191 = vdwg.mxu0
    %v1192 = vadd.f32 %v1166, %v1190
    %v1193 = vxor.u32 %v1192, 2147483648
    %v1194 = vmul.f32 %v1193, 1.442695
    %v1195 = vpow.pop %v1194
    %v1196 = vadd.f32 %v1195, 1.0
    %v1197 = vrcp.pop %v1196
    %v1198 = vmul.f32 %v1196, %v1197
    %v1199 = vsub.f32 1.0, %v1198
    %v1200 = vmul.f32 %v1197, %v1199
    %v1201 = vadd.f32 %v1197, %v1200
    %vm1202 = vweird.f32 %v1196
    %vm1203 = vweird.f32 %v1197
    %vm1204 = vmor %vm1202, %vm1203
    %v1205 = vsel %vm1204, %v1197, %v1201
    %v1206 = vand.u32 2147483647, %v1196
    %vm1207 = vcmp.eq.f32.partialorder %v1206, 8.507059e+37
    %v1208 = vand.u32 %v1196, 2147483648
    %v1209 = vor.u32 1.1754944e-38, %v1208
    %v1210 = vsel %vm1207, %v1209, %v1205
    %v1211 = vmul.f32 1.0, %v1210
    %1213 = vrot.lane.b32.xlu0 %v1190, 96
    %v1214 = vpop.permute.xlu0 %1213
    %v1216 = vmul.f32 %v1211, %v1214
    %1218 = vrot.lane.b32.xlu0 %v1216, 32
    %v1219 = vpop.permute.xlu0 %1218
    %v1221 = vadd.f32 %v1166, %v1219
    %v1222 = vtanh.pop %v1221
    %v1223 = vsub.f32 1.0, %v1211
    %1225 = vrot.lane.b32.xlu0 %v1222, 112
    %v1226 = vpop.permute.xlu0 %1225
    %v1228 = vmul.f32 %v1223, %v1226
    %v1229 = vmul.f32 %v1211, %v1161
    %v1230 = vadd.f32 %v1228, %v1229
    %v1231 = vrot.slane %v867, 5
    %v1233 = vrot.slane %v873, 2
    %v1235 = vsel %vm884, %v1231, %v1233
    %1237 = vrot.lane.b32.xlu0 %v1230, 112
    %v1238 = vpop.permute.xlu0 %1237
    %v1239 = vsel %vm889, %v1238, 0
    %1241 = vmatpush.msra.mxu0 0.0
    %1242 = vmatpush.msra.mxu0 0.0
    %1243 = vmatpush.msra.mxu0 0.0
    %1244 = vmatpush.msra.mxu0 0.0
    %1245 = vmatpush.msra.mxu0 0.0
    %1246 = vmatpush.msra.mxu0 0.0
    %1247 = vmatpush.msra.mxu0 0.0
    %1248 = vmatpush.msra.mxu0 0.0
    %1249 = vmatpush.msra.mxu0 0.0
    %1250 = vmatpush.msra.mxu0 0.0
    %1251 = vmatpush.msra.mxu0 0.0
    %1252 = vmatpush.msra.mxu0 0.0
    %1253 = vmatpush.msra.mxu0 0.0
    %1254 = vmatpush.msra.mxu0 0.0
    %1255 = vmatpush.msra.mxu0 %v878
    %1256 = vmatpush.msra.mxu0 %v877
    %1257 = vmatmul.f32.gmra.mxu0 %v1239
    %v1258 = vpop.f32.mrf.mxu0
    %v1259 = vadd.f32 %v887, %v1258
    %1260 = vdwg.mxu0
    %v1261 = vadd.f32 %v1235, %v1259
    %v1262 = vxor.u32 %v1261, 2147483648
    %v1263 = vmul.f32 %v1262, 1.442695
    %v1264 = vpow.pop %v1263
    %v1265 = vadd.f32 %v1264, 1.0
    %v1266 = vrcp.pop %v1265
    %v1267 = vmul.f32 %v1265, %v1266
    %v1268 = vsub.f32 1.0, %v1267
    %v1269 = vmul.f32 %v1266, %v1268
    %v1270 = vadd.f32 %v1266, %v1269
    %vm1271 = vweird.f32 %v1265
    %vm1272 = vweird.f32 %v1266
    %vm1273 = vmor %vm1271, %vm1272
    %v1274 = vsel %vm1273, %v1266, %v1270
    %v1275 = vand.u32 2147483647, %v1265
    %vm1276 = vcmp.eq.f32.partialorder %v1275, 8.507059e+37
    %v1277 = vand.u32 %v1265, 2147483648
    %v1278 = vor.u32 1.1754944e-38, %v1277
    %v1279 = vsel %vm1276, %v1278, %v1274
    %v1280 = vmul.f32 1.0, %v1279
    %1282 = vrot.lane.b32.xlu0 %v1259, 96
    %v1283 = vpop.permute.xlu0 %1282
    %v1285 = vmul.f32 %v1280, %v1283
    %1287 = vrot.lane.b32.xlu0 %v1285, 32
    %v1288 = vpop.permute.xlu0 %1287
    %v1290 = vadd.f32 %v1235, %v1288
    %v1291 = vtanh.pop %v1290
    %v1292 = vsub.f32 1.0, %v1280
    %1294 = vrot.lane.b32.xlu0 %v1291, 112
    %v1295 = vpop.permute.xlu0 %1294
    %v1297 = vmul.f32 %v1292, %v1295
    %v1298 = vmul.f32 %v1280, %v1230
    %v1299 = vadd.f32 %v1297, %v1298
    %v1300 = vrot.slane %v867, 6
    %v1302 = vrot.slane %v873, 3
    %v1304 = vsel %vm884, %v1300, %v1302
    %1306 = vrot.lane.b32.xlu0 %v1299, 112
    %v1307 = vpop.permute.xlu0 %1306
    %v1308 = vsel %vm889, %v1307, 0
    %1310 = vmatpush.msra.mxu0 0.0
    %1311 = vmatpush.msra.mxu0 0.0
    %1312 = vmatpush.msra.mxu0 0.0
    %1313 = vmatpush.msra.mxu0 0.0
    %1314 = vmatpush.msra.mxu0 0.0
    %1315 = vmatpush.msra.mxu0 0.0
    %1316 = vmatpush.msra.mxu0 0.0
    %1317 = vmatpush.msra.mxu0 0.0
    %1318 = vmatpush.msra.mxu0 0.0
    %1319 = vmatpush.msra.mxu0 0.0
    %1320 = vmatpush.msra.mxu0 0.0
    %1321 = vmatpush.msra.mxu0 0.0
    %1322 = vmatpush.msra.mxu0 0.0
    %1323 = vmatpush.msra.mxu0 0.0
    %1324 = vmatpush.msra.mxu0 %v878
    %1325 = vmatpush.msra.mxu0 %v877
    %1326 = vmatmul.f32.gmra.mxu0 %v1308
    %v1327 = vpop.f32.mrf.mxu0
    %v1328 = vadd.f32 %v887, %v1327
    %1329 = vdwg.mxu0
    %v1330 = vadd.f32 %v1304, %v1328
    %v1331 = vxor.u32 %v1330, 2147483648
    %v1332 = vmul.f32 %v1331, 1.442695
    %v1333 = vpow.pop %v1332
    %v1334 = vadd.f32 %v1333, 1.0
    %v1335 = vrcp.pop %v1334
    %v1336 = vmul.f32 %v1334, %v1335
    %v1337 = vsub.f32 1.0, %v1336
    %v1338 = vmul.f32 %v1335, %v1337
    %v1339 = vadd.f32 %v1335, %v1338
    %vm1340 = vweird.f32 %v1334
    %vm1341 = vweird.f32 %v1335
    %vm1342 = vmor %vm1340, %vm1341
    %v1343 = vsel %vm1342, %v1335, %v1339
    %v1344 = vand.u32 2147483647, %v1334
    %vm1345 = vcmp.eq.f32.partialorder %v1344, 8.507059e+37
    %v1346 = vand.u32 %v1334, 2147483648
    %v1347 = vor.u32 1.1754944e-38, %v1346
    %v1348 = vsel %vm1345, %v1347, %v1343
    %v1349 = vmul.f32 1.0, %v1348
    %1351 = vrot.lane.b32.xlu0 %v1328, 96
    %v1352 = vpop.permute.xlu0 %1351
    %v1354 = vmul.f32 %v1349, %v1352
    %1356 = vrot.lane.b32.xlu0 %v1354, 32
    %v1357 = vpop.permute.xlu0 %1356
    %v1359 = vadd.f32 %v1304, %v1357
    %v1360 = vtanh.pop %v1359
    %v1361 = vsub.f32 1.0, %v1349
    %1363 = vrot.lane.b32.xlu0 %v1360, 112
    %v1364 = vpop.permute.xlu0 %1363
    %v1366 = vmul.f32 %v1361, %v1364
    %v1367 = vmul.f32 %v1349, %v1299
    %v1368 = vadd.f32 %v1366, %v1367
    %v1369 = vrot.slane %v867, 7
    %v1371 = vrot.slane %v873, 4
    %v1373 = vsel %vm884, %v1369, %v1371
    %1375 = vrot.lane.b32.xlu0 %v1368, 112
    %v1376 = vpop.permute.xlu0 %1375
    %v1377 = vsel %vm889, %v1376, 0
    %1379 = vmatpush.msra.mxu0 0.0
    %1380 = vmatpush.msra.mxu0 0.0
    %1381 = vmatpush.msra.mxu0 0.0
    %1382 = vmatpush.msra.mxu0 0.0
    %1383 = vmatpush.msra.mxu0 0.0
    %1384 = vmatpush.msra.mxu0 0.0
    %1385 = vmatpush.msra.mxu0 0.0
    %1386 = vmatpush.msra.mxu0 0.0
    %1387 = vmatpush.msra.mxu0 0.0
    %1388 = vmatpush.msra.mxu0 0.0
    %1389 = vmatpush.msra.mxu0 0.0
    %1390 = vmatpush.msra.mxu0 0.0
    %1391 = vmatpush.msra.mxu0 0.0
    %1392 = vmatpush.msra.mxu0 0.0
    %1393 = vmatpush.msra.mxu0 %v878
    %1394 = vmatpush.msra.mxu0 %v877
    %1395 = vmatmul.f32.gmra.mxu0 %v1377
    %v1396 = vpop.f32.mrf.mxu0
    %v1397 = vadd.f32 %v887, %v1396
    %1398 = vdwg.mxu0
    %v1399 = vadd.f32 %v1373, %v1397
    %v1400 = vxor.u32 %v1399, 2147483648
    %v1401 = vmul.f32 %v1400, 1.442695
    %v1402 = vpow.pop %v1401
    %v1403 = vadd.f32 %v1402, 1.0
    %v1404 = vrcp.pop %v1403
    %v1405 = vmul.f32 %v1403, %v1404
    %v1406 = vsub.f32 1.0, %v1405
    %v1407 = vmul.f32 %v1404, %v1406
    %v1408 = vadd.f32 %v1404, %v1407
    %vm1409 = vweird.f32 %v1403
    %vm1410 = vweird.f32 %v1404
    %vm1411 = vmor %vm1409, %vm1410
    %v1412 = vsel %vm1411, %v1404, %v1408
    %v1413 = vand.u32 2147483647, %v1403
    %vm1414 = vcmp.eq.f32.partialorder %v1413, 8.507059e+37
    %v1415 = vand.u32 %v1403, 2147483648
    %v1416 = vor.u32 1.1754944e-38, %v1415
    %v1417 = vsel %vm1414, %v1416, %v1412
    %v1418 = vmul.f32 1.0, %v1417
    %1420 = vrot.lane.b32.xlu0 %v1397, 96
    %v1421 = vpop.permute.xlu0 %1420
    %v1423 = vmul.f32 %v1418, %v1421
    %1425 = vrot.lane.b32.xlu0 %v1423, 32
    %v1426 = vpop.permute.xlu0 %1425
    %v1428 = vadd.f32 %v1373, %v1426
    %v1429 = vtanh.pop %v1428
    %v1430 = vsub.f32 1.0, %v1418
    %1432 = vrot.lane.b32.xlu0 %v1429, 112
    %v1433 = vpop.permute.xlu0 %1432
    %v1435 = vmul.f32 %v1430, %v1433
    %v1436 = vmul.f32 %v1418, %v1368
    %v1437 = vadd.f32 %v1435, %v1436
    %v1438 = vrot.slane %v873, 5
    %v1440 = vsel %vm884, %v870, %v1438
    %1442 = vrot.lane.b32.xlu0 %v1437, 112
    %v1443 = vpop.permute.xlu0 %1442
    %v1444 = vsel %vm889, %v1443, 0
    %1446 = vmatpush.msra.mxu0 0.0
    %1447 = vmatpush.msra.mxu0 0.0
    %1448 = vmatpush.msra.mxu0 0.0
    %1449 = vmatpush.msra.mxu0 0.0
    %1450 = vmatpush.msra.mxu0 0.0
    %1451 = vmatpush.msra.mxu0 0.0
    %1452 = vmatpush.msra.mxu0 0.0
    %1453 = vmatpush.msra.mxu0 0.0
    %1454 = vmatpush.msra.mxu0 0.0
    %1455 = vmatpush.msra.mxu0 0.0
    %1456 = vmatpush.msra.mxu0 0.0
    %1457 = vmatpush.msra.mxu0 0.0
    %1458 = vmatpush.msra.mxu0 0.0
    %1459 = vmatpush.msra.mxu0 0.0
    %1460 = vmatpush.msra.mxu0 %v878
    %1461 = vmatpush.msra.mxu0 %v877
    %1462 = vmatmul.f32.gmra.mxu0 %v1444
    %v1463 = vpop.f32.mrf.mxu0
    %v1464 = vadd.f32 %v887, %v1463
    %1465 = vdwg.mxu0
    %v1466 = vadd.f32 %v1440, %v1464
    %v1467 = vxor.u32 %v1466, 2147483648
    %v1468 = vmul.f32 %v1467, 1.442695
    %v1469 = vpow.pop %v1468
    %v1470 = vadd.f32 %v1469, 1.0
    %v1471 = vrcp.pop %v1470
    %v1472 = vmul.f32 %v1470, %v1471
    %v1473 = vsub.f32 1.0, %v1472
    %v1474 = vmul.f32 %v1471, %v1473
    %v1475 = vadd.f32 %v1471, %v1474
    %vm1476 = vweird.f32 %v1470
    %vm1477 = vweird.f32 %v1471
    %vm1478 = vmor %vm1476, %vm1477
    %v1479 = vsel %vm1478, %v1471, %v1475
    %v1480 = vand.u32 2147483647, %v1470
    %vm1481 = vcmp.eq.f32.partialorder %v1480, 8.507059e+37
    %v1482 = vand.u32 %v1470, 2147483648
    %v1483 = vor.u32 1.1754944e-38, %v1482
    %v1484 = vsel %vm1481, %v1483, %v1479
    %v1485 = vmul.f32 1.0, %v1484
    %1487 = vrot.lane.b32.xlu0 %v1464, 96
    %v1488 = vpop.permute.xlu0 %1487
    %v1490 = vmul.f32 %v1485, %v1488
    %1492 = vrot.lane.b32.xlu0 %v1490, 32
    %v1493 = vpop.permute.xlu0 %1492
    %v1495 = vadd.f32 %v1440, %v1493
    %v1496 = vtanh.pop %v1495
    %v1497 = vsub.f32 1.0, %v1485
    %1499 = vrot.lane.b32.xlu0 %v1496, 112
    %v1500 = vpop.permute.xlu0 %1499
    %v1502 = vmul.f32 %v1497, %v1500
    %v1503 = vmul.f32 %v1485, %v1437
    %v1504 = vadd.f32 %v1502, %v1503
    %v1505 = vrot.slane %v870, 1
    %v1507 = vrot.slane %v873, 6
    %v1509 = vsel %vm884, %v1505, %v1507
    %1511 = vrot.lane.b32.xlu0 %v1504, 112
    %v1512 = vpop.permute.xlu0 %1511
    %v1513 = vsel %vm889, %v1512, 0
    %1515 = vmatpush.msra.mxu0 0.0
    %1516 = vmatpush.msra.mxu0 0.0
    %1517 = vmatpush.msra.mxu0 0.0
    %1518 = vmatpush.msra.mxu0 0.0
    %1519 = vmatpush.msra.mxu0 0.0
    %1520 = vmatpush.msra.mxu0 0.0
    %1521 = vmatpush.msra.mxu0 0.0
    %1522 = vmatpush.msra.mxu0 0.0
    %1523 = vmatpush.msra.mxu0 0.0
    %1524 = vmatpush.msra.mxu0 0.0
    %1525 = vmatpush.msra.mxu0 0.0
    %1526 = vmatpush.msra.mxu0 0.0
    %1527 = vmatpush.msra.mxu0 0.0
    %1528 = vmatpush.msra.mxu0 0.0
    %1529 = vmatpush.msra.mxu0 %v878
    %1530 = vmatpush.msra.mxu0 %v877
    %1531 = vmatmul.f32.gmra.mxu0 %v1513
    %v1532 = vpop.f32.mrf.mxu0
    %v1533 = vadd.f32 %v887, %v1532
    %1534 = vdwg.mxu0
    %v1535 = vadd.f32 %v1509, %v1533
    %v1536 = vxor.u32 %v1535, 2147483648
    %v1537 = vmul.f32 %v1536, 1.442695
    %v1538 = vpow.pop %v1537
    %v1539 = vadd.f32 %v1538, 1.0
    %v1540 = vrcp.pop %v1539
    %v1541 = vmul.f32 %v1539, %v1540
    %v1542 = vsub.f32 1.0, %v1541
    %v1543 = vmul.f32 %v1540, %v1542
    %v1544 = vadd.f32 %v1540, %v1543
    %vm1545 = vweird.f32 %v1539
    %vm1546 = vweird.f32 %v1540
    %vm1547 = vmor %vm1545, %vm1546
    %v1548 = vsel %vm1547, %v1540, %v1544
    %v1549 = vand.u32 2147483647, %v1539
    %vm1550 = vcmp.eq.f32.partialorder %v1549, 8.507059e+37
    %v1551 = vand.u32 %v1539, 2147483648
    %v1552 = vor.u32 1.1754944e-38, %v1551
    %v1553 = vsel %vm1550, %v1552, %v1548
    %v1554 = vmul.f32 1.0, %v1553
    %1556 = vrot.lane.b32.xlu0 %v1533, 96
    %v1557 = vpop.permute.xlu0 %1556
    %v1559 = vmul.f32 %v1554, %v1557
    %1561 = vrot.lane.b32.xlu0 %v1559, 32
    %v1562 = vpop.permute.xlu0 %1561
    %v1564 = vadd.f32 %v1509, %v1562
    %v1565 = vtanh.pop %v1564
    %v1566 = vsub.f32 1.0, %v1554
    %1568 = vrot.lane.b32.xlu0 %v1565, 112
    %v1569 = vpop.permute.xlu0 %1568
    %v1571 = vmul.f32 %v1566, %v1569
    %v1572 = vmul.f32 %v1554, %v1504
    %v1573 = vadd.f32 %v1571, %v1572
    %1575 = vrot.lane.b32.xlu0 %v1573, 112
    %v1576 = vpop.permute.xlu0 %1575
    %vm1578 = vcmask 123904
    %1579 = vst.msk [vmem:[%s12] sm:$0x3] %vm1578, %v1576
    %v1580 = vld [vmem:[%s10] sm:$0xff]
    %v1581 = vld [vmem:[%s10 + $0x8] sm:$0xff]
    %v1582 = vld [vmem:[%s11] sm:$0x1]
    %v1584 = vperm.slane %v1582, 0
    %v1586 = vsel %vm889, %v1576, 0
    %1588 = vmatpush.msra.mxu0 0.0
    %1589 = vmatpush.msra.mxu0 0.0
    %1590 = vmatpush.msra.mxu0 0.0
    %1591 = vmatpush.msra.mxu0 0.0
    %1592 = vmatpush.msra.mxu0 0.0
    %1593 = vmatpush.msra.mxu0 0.0
    %1594 = vmatpush.msra.mxu0 0.0
    %1595 = vmatpush.msra.mxu0 0.0
    %1596 = vmatpush.msra.mxu0 0.0
    %1597 = vmatpush.msra.mxu0 0.0
    %1598 = vmatpush.msra.mxu0 0.0
    %1599 = vmatpush.msra.mxu0 0.0
    %1600 = vmatpush.msra.mxu0 0.0
    %1601 = vmatpush.msra.mxu0 0.0
    %1602 = vmatpush.msra.mxu0 %v1581
    %1603 = vmatpush.msra.mxu0 %v1580
    %1604 = vmatmul.f32.gmra.mxu0 %v1586
    %v1605 = vpop.f32.mrf.mxu0
    %v1606 = vadd.f32 %v1584, %v1605
    %1607 = vdwg.mxu0
    %1609 = vrot.lane.b32.xlu0 %v1606, 96
    %v1610 = vpop.permute.xlu0 %1609
    %1611 = vrot.lane.b32.xlu0 %v1606, 64
    %v1612 = vpop.permute.xlu0 %1611
    %1613 = vrot.lane.b32.xlu0 %v1606, 32
    %v1614 = vpop.permute.xlu0 %1613
    %v1615 = vrot.slane %v826, 2
    %v1617 = vrot.slane %v828, 7
    %v1619 = vsel %vm884, %v1615, %v1617
    %v1620 = vrot.slane %v826, 3
    %v1622 = vsel %vm884, %v1620, %v828
    %v1623 = vrot.slane %v826, 4
    %v1625 = vrot.slane %v828, 1
    %v1627 = vsel %vm884, %v1623, %v1625
    %v1628 = vrot.slane %v826, 5
    %v1630 = vrot.slane %v828, 2
    %v1632 = vsel %vm884, %v1628, %v1630
    %v1633 = vsel %vm114, %v1606, 0
    %v1636 = vsel %vm114, %v1619, 0
    %1638 = vmatpush.xpose.msra.mxu0 0.0
    %1639 = vmatpush.xpose.msra.mxu0 0.0
    %1640 = vmatpush.xpose.msra.mxu0 0.0
    %1641 = vmatpush.xpose.msra.mxu0 0.0
    %1642 = vmatpush.xpose.msra.mxu0 0.0
    %1643 = vmatpush.xpose.msra.mxu0 0.0
    %1644 = vmatpush.xpose.msra.mxu0 0.0
    %1645 = vmatpush.xpose.msra.mxu0 0.0
    %1646 = vmatpush.xpose.msra.mxu0 0.0
    %1647 = vmatpush.xpose.msra.mxu0 0.0
    %1648 = vmatpush.xpose.msra.mxu0 0.0
    %1649 = vmatpush.xpose.msra.mxu0 0.0
    %1650 = vmatpush.xpose.msra.mxu0 0.0
    %1651 = vmatpush.xpose.msra.mxu0 0.0
    %1652 = vmatpush.xpose.msra.mxu0 0.0
    %1653 = vmatpush.xpose.msra.mxu0 %v1636
    %1654 = vmatmul.f32.gmra.mxu0 %v1633
    %v1655 = vpop.f32.mrf.mxu0
    %v1656 = vadd.f32 0.0, %v1655
    %1657 = vdwg.mxu0
    %v1658 = vsel %vm114, %v1610, 0
    %v1661 = vsel %vm114, %v1622, 0
    %1663 = vmatpush.xpose.msra.mxu0 0.0
    %1664 = vmatpush.xpose.msra.mxu0 0.0
    %1665 = vmatpush.xpose.msra.mxu0 0.0
    %1666 = vmatpush.xpose.msra.mxu0 0.0
    %1667 = vmatpush.xpose.msra.mxu0 0.0
    %1668 = vmatpush.xpose.msra.mxu0 0.0
    %1669 = vmatpush.xpose.msra.mxu0 0.0
    %1670 = vmatpush.xpose.msra.mxu0 0.0
    %1671 = vmatpush.xpose.msra.mxu0 0.0
    %1672 = vmatpush.xpose.msra.mxu0 0.0
    %1673 = vmatpush.xpose.msra.mxu0 0.0
    %1674 = vmatpush.xpose.msra.mxu0 0.0
    %1675 = vmatpush.xpose.msra.mxu0 0.0
    %1676 = vmatpush.xpose.msra.mxu0 0.0
    %1677 = vmatpush.xpose.msra.mxu0 0.0
    %1678 = vmatpush.xpose.msra.mxu0 %v1661
    %1679 = vmatmul.f32.gmra.mxu0 %v1658
    %v1680 = vpop.f32.mrf.mxu0
    %v1681 = vadd.f32 0.0, %v1680
    %1682 = vdwg.mxu0
    %v1683 = vsel %vm114, %v1612, 0
    %v1686 = vsel %vm114, %v1627, 0
    %1688 = vmatpush.xpose.msra.mxu0 0.0
    %1689 = vmatpush.xpose.msra.mxu0 0.0
    %1690 = vmatpush.xpose.msra.mxu0 0.0
    %1691 = vmatpush.xpose.msra.mxu0 0.0
    %1692 = vmatpush.xpose.msra.mxu0 0.0
    %1693 = vmatpush.xpose.msra.mxu0 0.0
    %1694 = vmatpush.xpose.msra.mxu0 0.0
    %1695 = vmatpush.xpose.msra.mxu0 0.0
    %1696 = vmatpush.xpose.msra.mxu0 0.0
    %1697 = vmatpush.xpose.msra.mxu0 0.0
    %1698 = vmatpush.xpose.msra.mxu0 0.0
    %1699 = vmatpush.xpose.msra.mxu0 0.0
    %1700 = vmatpush.xpose.msra.mxu0 0.0
    %1701 = vmatpush.xpose.msra.mxu0 0.0
    %1702 = vmatpush.xpose.msra.mxu0 0.0
    %1703 = vmatpush.xpose.msra.mxu0 %v1686
    %1704 = vmatmul.f32.gmra.mxu0 %v1683
    %v1705 = vpop.f32.mrf.mxu0
    %v1706 = vadd.f32 0.0, %v1705
    %1707 = vdwg.mxu0
    %v1708 = vsel %vm114, %v1614, 0
    %v1711 = vsel %vm114, %v1632, 0
    %1713 = vmatpush.xpose.msra.mxu0 0.0
    %1714 = vmatpush.xpose.msra.mxu0 0.0
    %1715 = vmatpush.xpose.msra.mxu0 0.0
    %1716 = vmatpush.xpose.msra.mxu0 0.0
    %1717 = vmatpush.xpose.msra.mxu0 0.0
    %1718 = vmatpush.xpose.msra.mxu0 0.0
    %1719 = vmatpush.xpose.msra.mxu0 0.0
    %1720 = vmatpush.xpose.msra.mxu0 0.0
    %1721 = vmatpush.xpose.msra.mxu0 0.0
    %1722 = vmatpush.xpose.msra.mxu0 0.0
    %1723 = vmatpush.xpose.msra.mxu0 0.0
    %1724 = vmatpush.xpose.msra.mxu0 0.0
    %1725 = vmatpush.xpose.msra.mxu0 0.0
    %1726 = vmatpush.xpose.msra.mxu0 0.0
    %1727 = vmatpush.xpose.msra.mxu0 0.0
    %1728 = vmatpush.xpose.msra.mxu0 %v1711
    %1729 = vmatmul.f32.gmra.mxu0 %v1708
    %v1730 = vpop.f32.mrf.mxu0
    %v1731 = vadd.f32 0.0, %v1730
    %1732 = vdwg.mxu0
    %vm1733 = vcmask 9216
    %v1734 = vsel %vm1733, %v1656, -inf
    %1735 = vmax.xlane.f32.xlu0 %v1734
    %v1736 = vpop.xlane.xlu0 %1735
    %v1737 = vsel %vm1733, %v1681, -inf
    %1738 = vmax.xlane.f32.xlu0 %v1737
    %v1739 = vpop.xlane.xlu0 %1738
    %v1740 = vsel %vm1733, %v1706, -inf
    %1741 = vmax.xlane.f32.xlu0 %v1740
    %v1742 = vpop.xlane.xlu0 %1741
    %v1743 = vsel %vm1733, %v1731, -inf
    %1744 = vmax.xlane.f32.xlu0 %v1743
    %v1745 = vpop.xlane.xlu0 %1744
    %v1746 = vsub.f32 %v1656, %v1736
    %v1747 = vsub.f32 %v1681, %v1739
    %v1748 = vsub.f32 %v1706, %v1742
    %v1749 = vsub.f32 %v1731, %v1745
    %v1750 = vmul.f32 %v1746, 1.442695
    %v1751 = vpow.pop %v1750
    %v1752 = vmul.f32 %v1747, 1.442695
    %v1753 = vpow.pop %v1752
    %v1754 = vmul.f32 %v1748, 1.442695
    %v1755 = vpow.pop %v1754
    %v1756 = vmul.f32 %v1749, 1.442695
    %v1757 = vpow.pop %v1756
    %v1758 = vsel %vm1733, %v1751, 0.0
    %1759 = vadd.xlane.f32.xlu0 %v1758
    %v1760 = vpop.xlane.xlu0 %1759
    %v1761 = vsel %vm1733, %v1753, 0.0
    %1762 = vadd.xlane.f32.xlu0 %v1761
    %v1763 = vpop.xlane.xlu0 %1762
    %v1764 = vsel %vm1733, %v1755, 0.0
    %1765 = vadd.xlane.f32.xlu0 %v1764
    %v1766 = vpop.xlane.xlu0 %1765
    %v1767 = vsel %vm1733, %v1757, 0.0
    %1768 = vadd.xlane.f32.xlu0 %v1767
    %v1769 = vpop.xlane.xlu0 %1768
    %v1770 = vlog2.pop %v1760
    %v1771 = vmul.f32 %v1770, 0.6931472
    %v1772 = vlog2.pop %v1763
    %v1773 = vmul.f32 %v1772, 0.6931472
    %v1774 = vlog2.pop %v1766
    %v1775 = vmul.f32 %v1774, 0.6931472
    %v1776 = vlog2.pop %v1769
    %v1777 = vmul.f32 %v1776, 0.6931472
    %v1778 = vadd.f32 %v1736, %v1771
    %v1779 = vadd.f32 %v1739, %v1773
    %v1780 = vadd.f32 %v1742, %v1775
    %v1781 = vadd.f32 %v1745, %v1777
    %v1782 = vlaneseq
    %v1783 = vshrl.u32 %v1782, 7
    %v1784 = vlaneseq
    %v1785 = vand.u32 %v1784, 127
    %vm1786 = vcmp.eq.s32.totalorder %v1783, %v1785
    %v1787 = vsel %vm1786, %v1656, 0.0
    %v1788 = vsel %vm1786, %v1681, 0.0
    %v1789 = vsel %vm1786, %v1706, 0.0
    %v1790 = vsel %vm1786, %v1731, 0.0
    %v1791 = vsel %vm1733, %v1787, 0.0
    %1792 = vadd.xlane.f32.xlu0 %v1791
    %v1793 = vpop.xlane.xlu0 %1792
    %v1794 = vsel %vm1733, %v1788, 0.0
    %1795 = vadd.xlane.f32.xlu0 %v1794
    %v1796 = vpop.xlane.xlu0 %1795
    %v1797 = vsel %vm1733, %v1789, 0.0
    %1798 = vadd.xlane.f32.xlu0 %v1797
    %v1799 = vpop.xlane.xlu0 %1798
    %v1800 = vsel %vm1733, %v1790, 0.0
    %1801 = vadd.xlane.f32.xlu0 %v1800
    %v1802 = vpop.xlane.xlu0 %1801
    %v1803 = vsub.f32 %v1793, %v1778
    %v1804 = vsub.f32 %v1796, %v1779
    %v1805 = vsub.f32 %v1799, %v1780
    %v1806 = vsub.f32 %v1802, %v1781
    %vm1807 = vcmp.eq.f32.partialorder %v1656, %v1736
    %vm1808 = vcmp.eq.f32.partialorder %v1681, %v1739
    %vm1809 = vcmp.eq.f32.partialorder %v1706, %v1742
    %vm1810 = vcmp.eq.f32.partialorder %v1731, %v1745
    %v1811 = vsel %vm1807, %v1785, 2
    %v1812 = vsel %vm1808, %v1785, 2
    %v1813 = vsel %vm1809, %v1785, 2
    %v1814 = vsel %vm1810, %v1785, 2
    %v1815 = vsel %vm1733, %v1811, 2147483647
    %v1816 = vand.u32 %v1815, 65535
    %v1817 = vshra.s32 %v1815, 16
    %v1818 = vcvt.s32.f32 %v1816
    %v1819 = vcvt.s32.f32 %v1817
    %1820 = vmin.xlane.f32.xlu0 %v1819
    %v1821 = vpop.xlane.xlu0 %1820
    %vm1822 = vcmp.eq.f32.partialorder %v1819, %v1821
    %v1823 = vsel %vm1822, %v1818, inf
    %1824 = vmin.xlane.f32.xlu0 %v1823
    %v1825 = vpop.xlane.xlu0 %1824
    %v1826 = vcvt.f32.s32 %v1825
    %v1827 = vcvt.f32.s32 %v1821
    %v1828 = vshll.u32 %v1827, 16
    %v1829 = vadd.s32 %v1828, %v1826
    %v1830 = vsel %vm1733, %v1812, 2147483647
    %v1831 = vand.u32 %v1830, 65535
    %v1832 = vshra.s32 %v1830, 16
    %v1833 = vcvt.s32.f32 %v1831
    %v1834 = vcvt.s32.f32 %v1832
    %1835 = vmin.xlane.f32.xlu0 %v1834
    %v1836 = vpop.xlane.xlu0 %1835
    %vm1837 = vcmp.eq.f32.partialorder %v1834, %v1836
    %v1838 = vsel %vm1837, %v1833, inf
    %1839 = vmin.xlane.f32.xlu0 %v1838
    %v1840 = vpop.xlane.xlu0 %1839
    %v1841 = vcvt.f32.s32 %v1840
    %v1842 = vcvt.f32.s32 %v1836
    %v1843 = vshll.u32 %v1842, 16
    %v1844 = vadd.s32 %v1843, %v1841
    %v1845 = vsel %vm1733, %v1813, 2147483647
    %v1846 = vand.u32 %v1845, 65535
    %v1847 = vshra.s32 %v1845, 16
    %v1848 = vcvt.s32.f32 %v1846
    %v1849 = vcvt.s32.f32 %v1847
    %1850 = vmin.xlane.f32.xlu0 %v1849
    %v1851 = vpop.xlane.xlu0 %1850
    %vm1852 = vcmp.eq.f32.partialorder %v1849, %v1851
    %v1853 = vsel %vm1852, %v1848, inf
    %1854 = vmin.xlane.f32.xlu0 %v1853
    %v1855 = vpop.xlane.xlu0 %1854
    %v1856 = vcvt.f32.s32 %v1855
    %v1857 = vcvt.f32.s32 %v1851
    %v1858 = vshll.u32 %v1857, 16
    %v1859 = vadd.s32 %v1858, %v1856
    %v1860 = vsel %vm1733, %v1814, 2147483647
    %v1861 = vand.u32 %v1860, 65535
    %v1862 = vshra.s32 %v1860, 16
    %v1863 = vcvt.s32.f32 %v1861
    %v1864 = vcvt.s32.f32 %v1862
    %1865 = vmin.xlane.f32.xlu0 %v1864
    %v1866 = vpop.xlane.xlu0 %1865
    %vm1867 = vcmp.eq.f32.partialorder %v1864, %v1866
    %v1868 = vsel %vm1867, %v1863, inf
    %1869 = vmin.xlane.f32.xlu0 %v1868
    %v1870 = vpop.xlane.xlu0 %1869
    %v1871 = vcvt.f32.s32 %v1870
    %v1872 = vcvt.f32.s32 %v1866
    %v1873 = vshll.u32 %v1872, 16
    %v1874 = vadd.s32 %v1873, %v1871
    %vm1875 = vcmp.eq.s32.totalorder %v1829, %v1783
    %vm1876 = vcmp.eq.s32.totalorder %v1844, %v1783
    %vm1877 = vcmp.eq.s32.totalorder %v1859, %v1783
    %vm1878 = vcmp.eq.s32.totalorder %v1874, %v1783
    %v1879 = vsel %vm1875, 1, 0
    %v1880 = vsel %vm1876, 1, 0
    %v1881 = vsel %vm1877, 1, 0
    %v1882 = vsel %vm1878, 1, 0
    %v1883 = vcvt.s32.f32 %v1879
    %v1884 = vcvt.s32.f32 %v1880
    %v1885 = vcvt.s32.f32 %v1881
    %v1886 = vcvt.s32.f32 %v1882
    %vm1887 = vcmask 1041408
    %v1888 = vsel %vm1887, %v1803, 0.0
    %v1889 = vsel %vm1887, %v1804, 0.0
    %v1890 = vadd.f32 %v1888, %v1889
    %v1891 = vsel %vm1887, %v1805, 0.0
    %v1892 = vadd.f32 %v1890, %v1891
    %v1893 = vsel %vm1887, %v1806, 0.0
    %v1894 = vadd.f32 %v1892, %v1893
    %v1895 = vsel %vm1887, %v1894, 0.0
    %v1896 = vrot.slane %v1895, 4
    %v1897 = vadd.f32 %v1895, %v1896
    %v1898 = vrot.slane %v1897, 2
    %v1899 = vadd.f32 %v1897, %v1898
    %v1900 = vrot.slane %v1899, 1
    %v1901 = vadd.f32 %v1899, %v1900
    %v1902 = vmul.f32 %v1901, -0.125
    %vm1903 = vcmask 0
    %1904 = vst.msk [vmem:[#allocation5] sm:$0x1] %vm1903, %v1902
    %v1905 = vsel %vm1887, %v1883, 0.0
    %v1906 = vsel %vm1887, %v1884, 0.0
    %v1907 = vadd.f32 %v1905, %v1906
    %v1908 = vsel %vm1887, %v1885, 0.0
    %v1909 = vadd.f32 %v1907, %v1908
    %v1910 = vsel %vm1887, %v1886, 0.0
    %v1911 = vadd.f32 %v1909, %v1910
    %v1912 = vsel %vm1887, %v1911, 0.0
    %v1913 = vrot.slane %v1912, 4
    %v1914 = vadd.f32 %v1912, %v1913
    %v1915 = vrot.slane %v1914, 2
    %v1916 = vadd.f32 %v1914, %v1915
    %v1917 = vrot.slane %v1916, 1
    %v1918 = vadd.f32 %v1916, %v1917
    %v1919 = vmul.f32 %v1918, 0.125
    %1920 = vst.msk [vmem:[#allocation7] sm:$0x1] %vm1903, %v1919
    // Predicated region
    $region50: #{cpc_forward.1} parent=1 // pred_check
      _
    $region51: #{cpc_forward.1} parent=1 // pred_check_branch
      %1922 = sbr.rel (0) target = $region53
    $region52: #{cpc_forward.1} parent=1 // pred_region
      _
    $region53: #{cpc_forward.1} parent=1 // pred_fallthru
      _
    // Predicated region
    $region54: #{cpc_forward.1} parent=1 // pred_check
      _
    $region55: #{cpc_forward.1} parent=1 // pred_check_branch
      %1924 = sbr.rel (0) target = $region57
    $region56: #{cpc_forward.1} parent=1 // pred_region
      %1926 = vsyncadd [#allocation6], 0
      %s1928 = sshll.u32 [#allocation5], 4
      %s1929 = int_to_ptr.vmem [resolvable:$true] %s1928
      %s1930 = sshll.u32 %s13, 4
      %s1931 = int_to_ptr.hbm [resolvable:$true] %s1930
      %1933 = dma.vmem_to_hbm [thread:$0]  %s1929, 16, %s1931, [#allocation6]
    $region57: #{cpc_forward.1} parent=1 // pred_fallthru
      _
    // Predicated region
    $region58: #{cpc_forward.1} parent=1 // pred_check
      _
    $region59: #{cpc_forward.1} parent=1 // pred_check_branch
      %1935 = sbr.rel (0) target = $region61
    $region60: #{cpc_forward.1} parent=1 // pred_region
      %1937 = vsyncadd [#allocation8], 0
      %s1939 = sshll.u32 [#allocation7], 4
      %s1940 = int_to_ptr.vmem [resolvable:$true] %s1939
      %s1941 = sshll.u32 %s14, 4
      %s1942 = int_to_ptr.hbm [resolvable:$true] %s1941
      %1944 = dma.vmem_to_hbm [thread:$0]  %s1940, 16, %s1942, [#allocation8]
    $region61: #{cpc_forward.1} parent=1 // pred_fallthru
      _
    // Predicated region
    $region62: #{cpc_forward.1} parent=1 // pred_check
      _
    $region63: #{cpc_forward.1} parent=1 // pred_check_branch
      %1946 = sbr.rel (0) target = $region65
    $region64: #{cpc_forward.1} parent=1 // pred_region
      _
    $region65: #{cpc_forward.1} parent=1 // pred_fallthru
      _
    // Predicated region
    $region66: #{cpc_forward.1} parent=1 // pred_check
      _
    $region67: #{cpc_forward.1} parent=1 // pred_check_branch
      %1948 = sbr.rel (0) target = $region69
    $region68: #{cpc_forward.1} parent=1 // pred_region
      %1950 = dma.done [#allocation6], 16
    $region69: #{cpc_forward.1} parent=1 // pred_fallthru
      _
    // Predicated region
    $region70: #{cpc_forward.1} parent=1 // pred_check
      _
    $region71: #{cpc_forward.1} parent=1 // pred_check_branch
      %1952 = sbr.rel (0) target = $region73
    $region72: #{cpc_forward.1} parent=1 // pred_region
      %1954 = dma.done [#allocation8], 16
    $region73: #{cpc_forward.1} parent=1 // pred_fallthru
      _
    %1955 = vsyncpa [#allocation6], 1
    %1956 = vsyncpa [#allocation8], 1

</llo_original>
